<compile_context>
chip_gen: v6e
topology: v6e:2x2x1
jax: 0.10.0
libtpu: 0.0.40
codegen_flags: <defaults>
</compile_context>

<pallas_src>
import math

import jax
import jax.numpy as jnp
from jax.experimental import pallas as pl
from jax.experimental.pallas import tpu as pltpu


# ----------------------------- model dims -----------------------------------
STATE_DIM = 11
ACTION_DIM = 3
T_DIM = 16
HIDDEN = 256
BATCH = 8
INPUT_DIM = STATE_DIM + ACTION_DIM + T_DIM      # 30
OUT_PAD = 128                                   # lane-dense padded output width

# ---- packed time-MLP buffer layout: shape (WT_ROWS, 2*T_DIM) ----------------
R_TW1 = 0                    # rows 0:16   Linear(16,32) weight (stored (in,out))
R_TW2 = T_DIM                # rows 16:48  Linear(32,16) weight, cols 0:16
R_TB1 = 3 * T_DIM            # row 48      bias (1,32)
R_TB2 = R_TB1 + 1            # row 49      bias (1,16) in cols 0:16
WT_ROWS = 56

# ---- packed mid/final buffer layout: shape (WK_ROWS, HIDDEN) ----------------
R_W1 = 0                     # rows 0:30   Linear(30,256) weight (rows 30:32 zero)
R_W2 = 32                    # rows 32:288 Linear(256,256)
R_W3 = R_W2 + HIDDEN         # rows 288:544
R_WF = R_W3 + HIDDEN         # rows 544:800 final Linear(256,3) padded to OUT_PAD cols
R_B1 = R_WF + HIDDEN         # row 800
R_B2 = R_B1 + 1              # row 801
R_B3 = R_B1 + 2              # row 802
R_BF = R_B1 + 3              # row 803 (cols 0:OUT_PAD, real cols 0:3)
WK_ROWS = 808


def _mish(v):
    # mish(x) = x * tanh(softplus(x)) = x * (1 - 2 / ((1 + e^x)^2 + 1))
    # One exp (EUP) + one approximate reciprocal (EUP). Clamp keeps (1+e^x)^2
    # finite; for x >= 25 the correction term is < 1e-21 so mish(x) == x.
    e = jnp.exp(jnp.minimum(v, 25.0))
    s = 1.0 + e
    denom = s * s + 1.0
    return v * (1.0 - 2.0 * pl.reciprocal(denom, approx=True))


# ------------------------------- kernel -------------------------------------
def mlp_kernel(time_ref, x_ref, cond_ref, wt_ref, wk_ref, out_ref):
    f32 = jnp.float32

    # ---- fused sinusoidal positional embedding (B,1) -> sin/cos (B,8) ------
    half = T_DIM // 2
    scale = math.log(10000.0) / (half - 1)
    k = jax.lax.broadcasted_iota(jnp.int32, (1, half), 1).astype(f32)
    freqs = jnp.exp(-scale * k)                       # (1, half)
    args = time_ref[...] * freqs                      # (B, half)
    emb_sin = jnp.sin(args)
    emb_cos = jnp.cos(args)

    # ---- time_mlp: Linear(16,32) -> Mish -> Linear(32,16) -------------------
    # concat([sin, cos]) @ TW1  ==  sin @ TW1[:8] + cos @ TW1[8:16]
    t = (jnp.dot(emb_sin, wt_ref[R_TW1:R_TW1 + half, :],
                 preferred_element_type=f32)
         + jnp.dot(emb_cos, wt_ref[R_TW1 + half:R_TW1 + T_DIM, :],
                   preferred_element_type=f32)
         + wt_ref[R_TB1:R_TB1 + 1, :])
    t = _mish(t)
    t = (jnp.dot(t, wt_ref[R_TW2:R_TW2 + 2 * T_DIM, 0:T_DIM],
                 preferred_element_type=f32)
         + wt_ref[R_TB2:R_TB2 + 1, 0:T_DIM])          # (B, 16)

    # ---- mid_layer 1: cat([x, t, cond]) @ W1 done as split row-blocks -------
    w1x = wk_ref[R_W1:R_W1 + ACTION_DIM, :]                           # (3,256)
    w1t = wk_ref[R_W1 + ACTION_DIM:R_W1 + ACTION_DIM + T_DIM, :]      # (16,256)
    w1c = wk_ref[R_W1 + ACTION_DIM + T_DIM:R_W1 + INPUT_DIM, :]       # (11,256)
    h = (jnp.dot(x_ref[...], w1x, preferred_element_type=f32)
         + jnp.dot(t, w1t, preferred_element_type=f32)
         + jnp.dot(cond_ref[...], w1c, preferred_element_type=f32)
         + wk_ref[R_B1:R_B1 + 1, :])
    h = _mish(h)

    # ---- mid_layer 2, 3 ------------------------------------------------------
    h = _mish(jnp.dot(h, wk_ref[R_W2:R_W2 + HIDDEN, :],
                      preferred_element_type=f32)
              + wk_ref[R_B2:R_B2 + 1, :])
    h = _mish(jnp.dot(h, wk_ref[R_W3:R_W3 + HIDDEN, :],
                      preferred_element_type=f32)
              + wk_ref[R_B3:R_B3 + 1, :])

    # ---- final_layer, lane-dense padded to OUT_PAD columns -------------------
    out_ref[...] = (jnp.dot(h, wk_ref[R_WF:R_WF + HIDDEN, 0:OUT_PAD],
                            preferred_element_type=f32)
                    + wk_ref[R_BF:R_BF + 1, 0:OUT_PAD])


# ------------------------------ parameters ----------------------------------
def _linear_params(key, fan_in, fan_out):
    """PyTorch-style default init: U(-1/sqrt(fan_in), 1/sqrt(fan_in)).
    Weight stored pre-transposed as (in, out); bias as (1, out)."""
    kw, kb = jax.random.split(key)
    bound = 1.0 / math.sqrt(fan_in)
    w = jax.random.uniform(kw, (fan_in, fan_out), jnp.float32, -bound, bound)
    b = jax.random.uniform(kb, (1, fan_out), jnp.float32, -bound, bound)
    return w, b


def init_params(key):
    keys = jax.random.split(key, 6)
    tw1, tb1 = _linear_params(keys[0], T_DIM, 2 * T_DIM)      # (16,32), (1,32)
    tw2, tb2 = _linear_params(keys[1], 2 * T_DIM, T_DIM)      # (32,16), (1,16)
    w1, b1 = _linear_params(keys[2], INPUT_DIM, HIDDEN)       # (30,256)
    w2, b2 = _linear_params(keys[3], HIDDEN, HIDDEN)
    w3, b3 = _linear_params(keys[4], HIDDEN, HIDDEN)
    wf, bf = _linear_params(keys[5], HIDDEN, ACTION_DIM)      # (256,3), (1,3)

    # Pack the time-MLP parameters into one (WT_ROWS, 2*T_DIM) buffer.
    wt = jnp.zeros((WT_ROWS, 2 * T_DIM), jnp.float32)
    wt = wt.at[R_TW1:R_TW1 + T_DIM, :].set(tw1)
    wt = wt.at[R_TW2:R_TW2 + 2 * T_DIM, 0:T_DIM].set(tw2)
    wt = wt.at[R_TB1, :].set(tb1[0])
    wt = wt.at[R_TB2, 0:T_DIM].set(tb2[0])

    # Pack the mid/final parameters (weights + bias rows) into one buffer.
    wk = jnp.zeros((WK_ROWS, HIDDEN), jnp.float32)
    wk = wk.at[R_W1:R_W1 + INPUT_DIM, :].set(w1)
    wk = wk.at[R_W2:R_W2 + HIDDEN, :].set(w2)
    wk = wk.at[R_W3:R_W3 + HIDDEN, :].set(w3)
    wk = wk.at[R_WF:R_WF + HIDDEN, 0:ACTION_DIM].set(wf)      # cols 3:OUT_PAD stay 0
    wk = wk.at[R_B1, :].set(b1[0])
    wk = wk.at[R_B2, :].set(b2[0])
    wk = wk.at[R_B3, :].set(b3[0])
    wk = wk.at[R_BF, 0:ACTION_DIM].set(bf[0])
    return wt, wk


# ------------------------------- wrapper -------------------------------------
@jax.jit
def mlp_forward(x, time, global_cond, wt, wk):
    if time.ndim > 1:
        time = jnp.squeeze(time, axis=1)
    time_col = time.astype(jnp.float32)[:, None]               # (B, 1)

    vmem = pl.BlockSpec(memory_space=pltpu.MemorySpace.VMEM)
    out_pad = pl.pallas_call(
        mlp_kernel,
        out_shape=jax.ShapeDtypeStruct((x.shape[0], OUT_PAD), jnp.float32),
        in_specs=[vmem, vmem, vmem, vmem, vmem],
        out_specs=vmem,
    )(time_col, x, global_cond, wt, wk)

    return out_pad[:, :ACTION_DIM]


# -------------------------------- main ---------------------------------------
if __name__ == "__main__":
    key = jax.random.PRNGKey(0)
    k_param, k_x, k_t, k_c = jax.random.split(key, 4)

    wt, wk = init_params(k_param)

    x = jax.random.normal(k_x, (BATCH, ACTION_DIM), jnp.float32)
    time = jax.random.uniform(k_t, (BATCH,), jnp.float32, 0.0, 100.0)
    global_cond = jax.random.normal(k_c, (BATCH, STATE_DIM), jnp.float32)

    out = mlp_forward(x, time, global_cond, wt, wk)
    jax.block_until_ready(out)

    assert out.shape == (BATCH, ACTION_DIM) and out.dtype == jnp.float32
    print("KERNEL_OK")
</pallas_src>

<mosaic_0001>
module attributes {stable_mosaic.version = 11 : i64} {
  func.func @mlp_kernel(%arg0: memref<8x1xf32, #tpu.memory_space<vmem>>, %arg1: memref<8x3xf32, #tpu.memory_space<vmem>>, %arg2: memref<8x11xf32, #tpu.memory_space<vmem>>, %arg3: memref<56x32xf32, #tpu.memory_space<vmem>>, %arg4: memref<808x256xf32, #tpu.memory_space<vmem>>, %arg5: memref<8x128xf32, #tpu.memory_space<vmem>>) attributes {dimension_semantics = [], scalar_prefetch = 0 : i64, scratch_operands = 0 : i64, tpu.core_type = #tpu.core_type<tc>} {
    %0 = tpu.iota {dimensions = array<i32: 1>} : vector<1x8xi32>
    %1 = arith.sitofp %0 : vector<1x8xi32> to vector<1x8xf32>
    %cst = arith.constant -1.31576288 : f32
    %2 = vector.broadcast %cst : f32 to vector<1x8xf32>
    %3 = arith.mulf %2, %1 : vector<1x8xf32>
    %4 = math.exp %3 : vector<1x8xf32>
    %c0 = arith.constant 0 : index
    %c0_0 = arith.constant 0 : index
    %5 = vector.load %arg0[%c0, %c0_0] : memref<8x1xf32, #tpu.memory_space<vmem>>, vector<8x1xf32>
    %6 = vector.broadcast %5 : vector<8x1xf32> to vector<8x8xf32>
    %7 = vector.broadcast %4 : vector<1x8xf32> to vector<8x8xf32>
    %8 = arith.mulf %6, %7 : vector<8x8xf32>
    %9 = math.sin %8 : vector<8x8xf32>
    %10 = math.cos %8 : vector<8x8xf32>
    %c0_1 = arith.constant 0 : index
    %c0_2 = arith.constant 0 : index
    %11 = vector.load %arg3[%c0_1, %c0_2] : memref<56x32xf32, #tpu.memory_space<vmem>>, vector<8x32xf32>
    %cst_3 = arith.constant dense<0.000000e+00> : vector<8x32xf32>
    %12 = tpu.matmul %9, %11, %cst_3 {dimension_numbers = #tpu.dot_dimension_numbers<[1], [0], [0], [1], [0, 0, 1, 1], [], []>} : vector<8x8xf32>, vector<8x32xf32>, vector<8x32xf32> -> vector<8x32xf32>
    %c8 = arith.constant 8 : index
    %c0_4 = arith.constant 0 : index
    %13 = vector.load %arg3[%c8, %c0_4] : memref<56x32xf32, #tpu.memory_space<vmem>>, vector<8x32xf32>
    %cst_5 = arith.constant dense<0.000000e+00> : vector<8x32xf32>
    %14 = tpu.matmul %10, %13, %cst_5 {dimension_numbers = #tpu.dot_dimension_numbers<[1], [0], [0], [1], [0, 0, 1, 1], [], []>} : vector<8x8xf32>, vector<8x32xf32>, vector<8x32xf32> -> vector<8x32xf32>
    %15 = arith.addf %12, %14 : vector<8x32xf32>
    %c48 = arith.constant 48 : index
    %c0_6 = arith.constant 0 : index
    %16 = vector.load %arg3[%c48, %c0_6] : memref<56x32xf32, #tpu.memory_space<vmem>>, vector<1x32xf32>
    %17 = vector.broadcast %16 : vector<1x32xf32> to vector<8x32xf32>
    %18 = arith.addf %15, %17 : vector<8x32xf32>
    %cst_7 = arith.constant 2.500000e+01 : f32
    %19 = vector.broadcast %cst_7 : f32 to vector<8x32xf32>
    %20 = arith.minimumf %18, %19 : vector<8x32xf32>
    %21 = math.exp %20 : vector<8x32xf32>
    %cst_8 = arith.constant 1.000000e+00 : f32
    %22 = vector.broadcast %cst_8 : f32 to vector<8x32xf32>
    %23 = arith.addf %22, %21 : vector<8x32xf32>
    %24 = arith.mulf %23, %23 : vector<8x32xf32>
    %cst_9 = arith.constant 1.000000e+00 : f32
    %25 = vector.broadcast %cst_9 : f32 to vector<8x32xf32>
    %26 = arith.addf %24, %25 : vector<8x32xf32>
    %27 = tpu.reciprocal %26 {approx = true} : vector<8x32xf32> -> vector<8x32xf32>
    %cst_10 = arith.constant 2.000000e+00 : f32
    %28 = vector.broadcast %cst_10 : f32 to vector<8x32xf32>
    %29 = arith.mulf %28, %27 : vector<8x32xf32>
    %cst_11 = arith.constant 1.000000e+00 : f32
    %30 = vector.broadcast %cst_11 : f32 to vector<8x32xf32>
    %31 = arith.subf %30, %29 : vector<8x32xf32>
    %32 = arith.mulf %18, %31 : vector<8x32xf32>
    %c16 = arith.constant 16 : index
    %c0_12 = arith.constant 0 : index
    %33 = vector.load %arg3[%c16, %c0_12] : memref<56x32xf32, #tpu.memory_space<vmem>>, vector<32x16xf32>
    %cst_13 = arith.constant dense<0.000000e+00> : vector<8x16xf32>
    %34 = tpu.matmul %32, %33, %cst_13 {dimension_numbers = #tpu.dot_dimension_numbers<[1], [0], [0], [1], [0, 0, 1, 1], [], []>} : vector<8x32xf32>, vector<32x16xf32>, vector<8x16xf32> -> vector<8x16xf32>
    %c49 = arith.constant 49 : index
    %c0_14 = arith.constant 0 : index
    %35 = vector.load %arg3[%c49, %c0_14] : memref<56x32xf32, #tpu.memory_space<vmem>>, vector<1x16xf32>
    %36 = vector.broadcast %35 : vector<1x16xf32> to vector<8x16xf32>
    %37 = arith.addf %34, %36 : vector<8x16xf32>
    %c0_15 = arith.constant 0 : index
    %c0_16 = arith.constant 0 : index
    %38 = vector.load %arg4[%c0_15, %c0_16] : memref<808x256xf32, #tpu.memory_space<vmem>>, vector<3x256xf32>
    %c3 = arith.constant 3 : index
    %c0_17 = arith.constant 0 : index
    %39 = vector.load %arg4[%c3, %c0_17] : memref<808x256xf32, #tpu.memory_space<vmem>>, vector<16x256xf32>
    %c19 = arith.constant 19 : index
    %c0_18 = arith.constant 0 : index
    %40 = vector.load %arg4[%c19, %c0_18] : memref<808x256xf32, #tpu.memory_space<vmem>>, vector<11x256xf32>
    %c0_19 = arith.constant 0 : index
    %c0_20 = arith.constant 0 : index
    %41 = vector.load %arg1[%c0_19, %c0_20] : memref<8x3xf32, #tpu.memory_space<vmem>>, vector<8x3xf32>
    %cst_21 = arith.constant dense<0.000000e+00> : vector<8x256xf32>
    %42 = tpu.matmul %41, %38, %cst_21 {dimension_numbers = #tpu.dot_dimension_numbers<[1], [0], [0], [1], [0, 0, 1, 1], [], []>} : vector<8x3xf32>, vector<3x256xf32>, vector<8x256xf32> -> vector<8x256xf32>
    %cst_22 = arith.constant dense<0.000000e+00> : vector<8x256xf32>
    %43 = tpu.matmul %37, %39, %cst_22 {dimension_numbers = #tpu.dot_dimension_numbers<[1], [0], [0], [1], [0, 0, 1, 1], [], []>} : vector<8x16xf32>, vector<16x256xf32>, vector<8x256xf32> -> vector<8x256xf32>
    %44 = arith.addf %42, %43 : vector<8x256xf32>
    %c0_23 = arith.constant 0 : index
    %c0_24 = arith.constant 0 : index
    %45 = vector.load %arg2[%c0_23, %c0_24] : memref<8x11xf32, #tpu.memory_space<vmem>>, vector<8x11xf32>
    %cst_25 = arith.constant dense<0.000000e+00> : vector<8x256xf32>
    %46 = tpu.matmul %45, %40, %cst_25 {dimension_numbers = #tpu.dot_dimension_numbers<[1], [0], [0], [1], [0, 0, 1, 1], [], []>} : vector<8x11xf32>, vector<11x256xf32>, vector<8x256xf32> -> vector<8x256xf32>
    %47 = arith.addf %44, %46 : vector<8x256xf32>
    %c800 = arith.constant 800 : index
    %c0_26 = arith.constant 0 : index
    %48 = vector.load %arg4[%c800, %c0_26] : memref<808x256xf32, #tpu.memory_space<vmem>>, vector<1x256xf32>
    %49 = vector.broadcast %48 : vector<1x256xf32> to vector<8x256xf32>
    %50 = arith.addf %47, %49 : vector<8x256xf32>
    %cst_27 = arith.constant 2.500000e+01 : f32
    %51 = vector.broadcast %cst_27 : f32 to vector<8x256xf32>
    %52 = arith.minimumf %50, %51 : vector<8x256xf32>
    %53 = math.exp %52 : vector<8x256xf32>
    %cst_28 = arith.constant 1.000000e+00 : f32
    %54 = vector.broadcast %cst_28 : f32 to vector<8x256xf32>
    %55 = arith.addf %54, %53 : vector<8x256xf32>
    %56 = arith.mulf %55, %55 : vector<8x256xf32>
    %cst_29 = arith.constant 1.000000e+00 : f32
    %57 = vector.broadcast %cst_29 : f32 to vector<8x256xf32>
    %58 = arith.addf %56, %57 : vector<8x256xf32>
    %59 = tpu.reciprocal %58 {approx = true} : vector<8x256xf32> -> vector<8x256xf32>
    %cst_30 = arith.constant 2.000000e+00 : f32
    %60 = vector.broadcast %cst_30 : f32 to vector<8x256xf32>
    %61 = arith.mulf %60, %59 : vector<8x256xf32>
    %cst_31 = arith.constant 1.000000e+00 : f32
    %62 = vector.broadcast %cst_31 : f32 to vector<8x256xf32>
    %63 = arith.subf %62, %61 : vector<8x256xf32>
    %64 = arith.mulf %50, %63 : vector<8x256xf32>
    %c32 = arith.constant 32 : index
    %c0_32 = arith.constant 0 : index
    %65 = vector.load %arg4[%c32, %c0_32] : memref<808x256xf32, #tpu.memory_space<vmem>>, vector<256x256xf32>
    %cst_33 = arith.constant dense<0.000000e+00> : vector<8x256xf32>
    %66 = tpu.matmul %64, %65, %cst_33 {dimension_numbers = #tpu.dot_dimension_numbers<[1], [0], [0], [1], [0, 0, 1, 1], [], []>} : vector<8x256xf32>, vector<256x256xf32>, vector<8x256xf32> -> vector<8x256xf32>
    %c801 = arith.constant 801 : index
    %c0_34 = arith.constant 0 : index
    %67 = vector.load %arg4[%c801, %c0_34] : memref<808x256xf32, #tpu.memory_space<vmem>>, vector<1x256xf32>
    %68 = vector.broadcast %67 : vector<1x256xf32> to vector<8x256xf32>
    %69 = arith.addf %66, %68 : vector<8x256xf32>
    %cst_35 = arith.constant 2.500000e+01 : f32
    %70 = vector.broadcast %cst_35 : f32 to vector<8x256xf32>
    %71 = arith.minimumf %69, %70 : vector<8x256xf32>
    %72 = math.exp %71 : vector<8x256xf32>
    %cst_36 = arith.constant 1.000000e+00 : f32
    %73 = vector.broadcast %cst_36 : f32 to vector<8x256xf32>
    %74 = arith.addf %73, %72 : vector<8x256xf32>
    %75 = arith.mulf %74, %74 : vector<8x256xf32>
    %cst_37 = arith.constant 1.000000e+00 : f32
    %76 = vector.broadcast %cst_37 : f32 to vector<8x256xf32>
    %77 = arith.addf %75, %76 : vector<8x256xf32>
    %78 = tpu.reciprocal %77 {approx = true} : vector<8x256xf32> -> vector<8x256xf32>
    %cst_38 = arith.constant 2.000000e+00 : f32
    %79 = vector.broadcast %cst_38 : f32 to vector<8x256xf32>
    %80 = arith.mulf %79, %78 : vector<8x256xf32>
    %cst_39 = arith.constant 1.000000e+00 : f32
    %81 = vector.broadcast %cst_39 : f32 to vector<8x256xf32>
    %82 = arith.subf %81, %80 : vector<8x256xf32>
    %83 = arith.mulf %69, %82 : vector<8x256xf32>
    %c288 = arith.constant 288 : index
    %c0_40 = arith.constant 0 : index
    %84 = vector.load %arg4[%c288, %c0_40] : memref<808x256xf32, #tpu.memory_space<vmem>>, vector<256x256xf32>
    %cst_41 = arith.constant dense<0.000000e+00> : vector<8x256xf32>
    %85 = tpu.matmul %83, %84, %cst_41 {dimension_numbers = #tpu.dot_dimension_numbers<[1], [0], [0], [1], [0, 0, 1, 1], [], []>} : vector<8x256xf32>, vector<256x256xf32>, vector<8x256xf32> -> vector<8x256xf32>
    %c802 = arith.constant 802 : index
    %c0_42 = arith.constant 0 : index
    %86 = vector.load %arg4[%c802, %c0_42] : memref<808x256xf32, #tpu.memory_space<vmem>>, vector<1x256xf32>
    %87 = vector.broadcast %86 : vector<1x256xf32> to vector<8x256xf32>
    %88 = arith.addf %85, %87 : vector<8x256xf32>
    %cst_43 = arith.constant 2.500000e+01 : f32
    %89 = vector.broadcast %cst_43 : f32 to vector<8x256xf32>
    %90 = arith.minimumf %88, %89 : vector<8x256xf32>
    %91 = math.exp %90 : vector<8x256xf32>
    %cst_44 = arith.constant 1.000000e+00 : f32
    %92 = vector.broadcast %cst_44 : f32 to vector<8x256xf32>
    %93 = arith.addf %92, %91 : vector<8x256xf32>
    %94 = arith.mulf %93, %93 : vector<8x256xf32>
    %cst_45 = arith.constant 1.000000e+00 : f32
    %95 = vector.broadcast %cst_45 : f32 to vector<8x256xf32>
    %96 = arith.addf %94, %95 : vector<8x256xf32>
    %97 = tpu.reciprocal %96 {approx = true} : vector<8x256xf32> -> vector<8x256xf32>
    %cst_46 = arith.constant 2.000000e+00 : f32
    %98 = vector.broadcast %cst_46 : f32 to vector<8x256xf32>
    %99 = arith.mulf %98, %97 : vector<8x256xf32>
    %cst_47 = arith.constant 1.000000e+00 : f32
    %100 = vector.broadcast %cst_47 : f32 to vector<8x256xf32>
    %101 = arith.subf %100, %99 : vector<8x256xf32>
    %102 = arith.mulf %88, %101 : vector<8x256xf32>
    %c544 = arith.constant 544 : index
    %c0_48 = arith.constant 0 : index
    %103 = vector.load %arg4[%c544, %c0_48] : memref<808x256xf32, #tpu.memory_space<vmem>>, vector<256x128xf32>
    %cst_49 = arith.constant dense<0.000000e+00> : vector<8x128xf32>
    %104 = tpu.matmul %102, %103, %cst_49 {dimension_numbers = #tpu.dot_dimension_numbers<[1], [0], [0], [1], [0, 0, 1, 1], [], []>} : vector<8x256xf32>, vector<256x128xf32>, vector<8x128xf32> -> vector<8x128xf32>
    %c803 = arith.constant 803 : index
    %c0_50 = arith.constant 0 : index
    %105 = vector.load %arg4[%c803, %c0_50] : memref<808x256xf32, #tpu.memory_space<vmem>>, vector<1x128xf32>
    %106 = vector.broadcast %105 : vector<1x128xf32> to vector<8x128xf32>
    %107 = arith.addf %104, %106 : vector<8x128xf32>
    %c0_51 = arith.constant 0 : index
    %c0_52 = arith.constant 0 : index
    %108 = vector.load %arg5[%c0_51, %c0_52] : memref<8x128xf32, #tpu.memory_space<vmem>>, vector<8x128xf32>
    tpu.vector_store %arg5[%c0_51, %c0_52], %107 {strides = array<i32>} : memref<8x128xf32, #tpu.memory_space<vmem>>, vector<8x128xf32>,
    return
  }
}

</mosaic_0001>

<llo_original>
// kernel: mlp_forward.1
$region0: #{mlp_forward.1}
  #allocation0 [shape = 'u32[]', space=smem, size = 0x4, offset = 0x4, fixed_abs, tag = 'smem constant byte address 0x4 - core index']
  #allocation1 [shape = 'u32[144,128]{1,0:T(1,128)}', space=vmem, size = 0x12000, scoped, tag = 'internal scratch']
  %s0 = inlined_call_operand.vmem [shape: f32[8,1], index: 0, kind: input, shape index: {}]
  %s1 = inlined_call_operand.vmem [shape: f32[8,3], index: 1, kind: input, shape index: {}]
  %s2 = inlined_call_operand.vmem [shape: f32[8,11], index: 2, kind: input, shape index: {}]
  %s3 = inlined_call_operand.vmem [shape: f32[56,32], index: 3, kind: input, shape index: {}]
  %s4 = inlined_call_operand.hbm [shape: f32[808,256], index: 4, kind: input, shape index: {}]
  %s5 = inlined_call_operand.vmem [shape: f32[8,128], index: 5, kind: output, shape index: {}]
  %s6 = sld [smem:[#allocation0]]
  $region34: #{mlp_forward.1} parent=0
    _
  %s8 = ssub.s32 1, %s6
  %s9 = scalar_select 0, %s8, %s6
  $region1: #{mlp_forward.1} parent=0
    #allocation2 [shape = 'u8[827392]{0}', space=vmem, size = 0xca000, scoped, tag = 'input window, operand 4, single buffered']
    #allocation3 [shape = 's32[1]{0}', space=sflag, size = 0x4, scoped, tag = 'scoped memory for mlp_forward.1']
    %10 = vsyncpa [#allocation3], 0
    // Predicated region
    $region2: #{mlp_forward.1} parent=1 // pred_check
      _
    $region3: #{mlp_forward.1} parent=1 // pred_check_branch
      %12 = sbr.rel (0) target = $region5
    $region4: #{mlp_forward.1} parent=1 // pred_region
      _
    $region5: #{mlp_forward.1} parent=1 // pred_fallthru
      _
    // Predicated region
    $region6: #{mlp_forward.1} parent=1 // pred_check
      _
    $region7: #{mlp_forward.1} parent=1 // pred_check_branch
      %14 = sbr.rel (0) target = $region9
    $region8: #{mlp_forward.1} parent=1 // pred_region
      _
    $region9: #{mlp_forward.1} parent=1 // pred_fallthru
      _
    // Predicated region
    $region10: #{mlp_forward.1} parent=1 // pred_check
      _
    $region11: #{mlp_forward.1} parent=1 // pred_check_branch
      %16 = sbr.rel (0) target = $region13
    $region12: #{mlp_forward.1} parent=1 // pred_region
      _
    $region13: #{mlp_forward.1} parent=1 // pred_fallthru
      _
    // Predicated region
    $region14: #{mlp_forward.1} parent=1 // pred_check
      _
    $region15: #{mlp_forward.1} parent=1 // pred_check_branch
      %18 = sbr.rel (0) target = $region17
    $region16: #{mlp_forward.1} parent=1 // pred_region
      _
    $region17: #{mlp_forward.1} parent=1 // pred_fallthru
      _
    // Predicated region
    $region18: #{mlp_forward.1} parent=1 // pred_check
      _
    $region19: #{mlp_forward.1} parent=1 // pred_check_branch
      %20 = sbr.rel (0) target = $region21
    $region20: #{mlp_forward.1} parent=1 // pred_region
      %s22 = ssub.s32 25856, 25856
      %23 = vsyncadd [#allocation3], %s22
      %s24 = sshll.u32 [#allocation2], 4
      %s25 = int_to_ptr.vmem [resolvable:$true] %s24
      %30 = dma.hbm_to_vmem [thread:$0]  %s4, 25856, %s25, [#allocation3], 256, 256, 16
    $region21: #{mlp_forward.1} parent=1 // pred_fallthru
      _
    // Predicated region
    $region22: #{mlp_forward.1} parent=1 // pred_check
      _
    $region23: #{mlp_forward.1} parent=1 // pred_check_branch
      %32 = sbr.rel (0) target = $region25
    $region24: #{mlp_forward.1} parent=1 // pred_region
      %33 = dma.done [#allocation3], 25856
    $region25: #{mlp_forward.1} parent=1 // pred_fallthru
      _
    %v34 = vlaneseq
    %v35 = vand.u32 %v34, 127
    %v36 = vcvt.s32.f32 %v35
    %v37 = vmul.f32 %v36, -1.3157629
    %v38 = vmul.f32 %v37, 1.442695
    %v39 = vpow.pop %v38
    %v40 = vld [vmem:[%s0] sm:$0xff]
    %42 = vset.pattern.permute.xlu0 0
    %43 = vperm.xlu0 %42, %v40
    %v44 = vpop.permute.xlu0 %43
    %v46 = vmul.f32 %v44, %v39
    %v47 = vand.u32 2147483647, %v46
    %vm48 = vcmp.le.f32.partialorder %v47, 0.7853982
    %vm49 = vcmp.lt.s32.totalorder %v46, 0
    %v50 = vand.u32 %v46, 2139095040
    %v51 = vshrl.u32 %v50, 23
    %v52 = vsub.s32 %v51, 127
    %v53 = vand.u32 2147483647, %v46
    %v54 = vand.u32 %v53, 8388607
    %v55 = vor.u32 %v54, 8388608
    %v56 = vsub.s32 0, %v55
    %v57 = vadd.s32 %v52, 1
    %vm58 = vcmp.gt.s32.totalorder %v57, 0
    %v59 = vsel %vm58, %v57, 0
    %v60 = vshrl.u32 %v59, 5
    %v61 = vand.u32 %v59, 31
    %v62 = vsub.s32 32, %v61
    %v63 = vshrl.u32 683565275, %v62
    %v64 = vshll.u32 683565275, %v61
    %v65 = vshrl.u32 2475754826, %v62
    %v66 = vor.u32 %v64, %v65
    %v67 = vshll.u32 2475754826, %v61
    %v68 = vshrl.u32 2131351028, %v62
    %v69 = vor.u32 %v67, %v68
    %v70 = vshll.u32 2131351028, %v61
    %v71 = vshrl.u32 2102212464, %v62
    %v72 = vor.u32 %v70, %v71
    %v73 = vshll.u32 2102212464, %v61
    %v74 = vshrl.u32 920167782, %v62
    %v75 = vor.u32 %v73, %v74
    %v76 = vshll.u32 920167782, %v61
    %v77 = vshrl.u32 1326507024, %v62
    %v78 = vor.u32 %v76, %v77
    %vm79 = vcmp.lt.s32.totalorder %v60, 1
    %vm80 = vcmp.lt.s32.totalorder %v60, 2
    %vm81 = vcmp.lt.s32.totalorder %v60, 3
    %vm82 = vcmp.lt.s32.totalorder %v60, 4
    %v83 = vsel %vm79, %v63, %v66
    %v84 = vsel %vm82, %v72, 2102212464
    %v85 = vsel %vm81, %v69, %v84
    %v86 = vsel %vm80, %v83, %v85
    %v87 = vsel %vm79, %v66, %v69
    %v88 = vsel %vm82, %v75, 920167782
    %v89 = vsel %vm81, %v72, %v88
    %v90 = vsel %vm80, %v87, %v89
    %v91 = vsel %vm79, %v69, %v72
    %v92 = vsel %vm82, %v78, 1326507024
    %v93 = vsel %vm81, %v75, %v92
    %v94 = vsel %vm80, %v91, %v93
    %v95 = vshll.u32 %v55, 8
    %v96 = vmul.u32.u64.compose %v95, %v94
    %v97 = vextract.low.u32 %v96
    %v98 = vextract.high.u32 %v96
    %v99 = vmul.u32.u64.compose %v95, %v90
    %v100 = vextract.low.u32 %v99
    %v101 = vextract.high.u32 %v99
    %v102 = vmul.u32 %v95, %v86
    %v103 = vadd.s32 %v98, %v100
    %vm104 = vc.u32 %v98, %v100
    %v105 = vadd.s32 %v101, 1
    %v106 = vsel %vm104, %v105, %v101
    %v107 = vadd.s32 %v102, %v106
    %v108 = vadd.s32 %v107, 536870912
    %v109 = vshrl.u32 %v108, 30
    %v110 = vshll.u32 %v109, 30
    %v111 = vsub.s32 %v107, %v110
    %vm112 = vcmp.lt.s32.totalorder %v111, 0
    %v113 = vsub.s32 0, %v111
    %v114 = vsel %vm112, %v113, %v111
    %v115 = vclz %v114
    %v116 = vsub.s32 %v115, 2
    %vm117 = vcmp.gt.s32.totalorder 0, %v116
    %v118 = vsel %vm117, 0, %v116
    %v119 = vsub.s32 32, %v118
    %v120 = vshll.u32 %v111, %v118
    %v121 = vshrl.u32 %v103, %v119
    %v122 = vor.u32 %v120, %v121
    %v123 = vsub.s32 4294967266, %v118
    %v124 = vadd.s32 %v123, 127
    %v125 = vshll.u32 %v124, 23
    %v126 = vor.u32 4788187, %v125
    %v127 = vand.u32 2147483647, %v126
    %v129 = vcvt.s32.f32 %v122
    %v130 = vmul.f32 %v129, %v127
    %v131 = vxor.u32 %v130, 2147483648
    %v132 = vsel %vm49, %v131, %v130
    %v133 = vsub.s32 4, %v109
    %v134 = vsel %vm49, %v133, %v109
    %v135 = vsel %vm48, %v46, %v132
    %v136 = vsel %vm48, 0, %v134
    %v137 = vcosq.f32.pop %v135
    %v138 = vsinq.f32.pop %v135
    %vm139 = vweird.f32 %v46
    %v140 = vadd.s32 %v136, 3
    %v141 = vand.u32 %v140, 3
    %vm142 = vcmp.lt.s32.totalorder %v141, 2
    %vm143 = vcmp.eq.s32.totalorder %v141, 0
    %v144 = vxor.u32 %v138, 2147483648
    %v145 = vsel %vm143, %v137, %v144
    %vm146 = vcmp.eq.s32.totalorder %v141, 2
    %v147 = vxor.u32 %v137, 2147483648
    %v148 = vsel %vm146, %v147, %v138
    %v149 = vsel %vm142, %v145, %v148
    %v150 = vsel %vm139, nan, %v149
    %v151 = vand.u32 2147483647, %v46
    %vm152 = vcmp.le.f32.partialorder %v151, 0.7853982
    %vm153 = vcmp.lt.s32.totalorder %v46, 0
    %v154 = vand.u32 %v46, 2139095040
    %v155 = vshrl.u32 %v154, 23
    %v156 = vsub.s32 %v155, 127
    %v157 = vand.u32 2147483647, %v46
    %v158 = vand.u32 %v157, 8388607
    %v159 = vor.u32 %v158, 8388608
    %v160 = vsub.s32 0, %v159
    %v161 = vadd.s32 %v156, 1
    %vm162 = vcmp.gt.s32.totalorder %v161, 0
    %v163 = vsel %vm162, %v161, 0
    %v164 = vshrl.u32 %v163, 5
    %v165 = vand.u32 %v163, 31
    %v166 = vsub.s32 32, %v165
    %v167 = vshrl.u32 683565275, %v166
    %v168 = vshll.u32 683565275, %v165
    %v169 = vshrl.u32 2475754826, %v166
    %v170 = vor.u32 %v168, %v169
    %v171 = vshll.u32 2475754826, %v165
    %v172 = vshrl.u32 2131351028, %v166
    %v173 = vor.u32 %v171, %v172
    %v174 = vshll.u32 2131351028, %v165
    %v175 = vshrl.u32 2102212464, %v166
    %v176 = vor.u32 %v174, %v175
    %v177 = vshll.u32 2102212464, %v165
    %v178 = vshrl.u32 920167782, %v166
    %v179 = vor.u32 %v177, %v178
    %v180 = vshll.u32 920167782, %v165
    %v181 = vshrl.u32 1326507024, %v166
    %v182 = vor.u32 %v180, %v181
    %vm183 = vcmp.lt.s32.totalorder %v164, 1
    %vm184 = vcmp.lt.s32.totalorder %v164, 2
    %vm185 = vcmp.lt.s32.totalorder %v164, 3
    %vm186 = vcmp.lt.s32.totalorder %v164, 4
    %v187 = vsel %vm183, %v167, %v170
    %v188 = vsel %vm186, %v176, 2102212464
    %v189 = vsel %vm185, %v173, %v188
    %v190 = vsel %vm184, %v187, %v189
    %v191 = vsel %vm183, %v170, %v173
    %v192 = vsel %vm186, %v179, 920167782
    %v193 = vsel %vm185, %v176, %v192
    %v194 = vsel %vm184, %v191, %v193
    %v195 = vsel %vm183, %v173, %v176
    %v196 = vsel %vm186, %v182, 1326507024
    %v197 = vsel %vm185, %v179, %v196
    %v198 = vsel %vm184, %v195, %v197
    %v199 = vshll.u32 %v159, 8
    %v200 = vmul.u32.u64.compose %v199, %v198
    %v201 = vextract.low.u32 %v200
    %v202 = vextract.high.u32 %v200
    %v203 = vmul.u32.u64.compose %v199, %v194
    %v204 = vextract.low.u32 %v203
    %v205 = vextract.high.u32 %v203
    %v206 = vmul.u32 %v199, %v190
    %v207 = vadd.s32 %v202, %v204
    %vm208 = vc.u32 %v202, %v204
    %v209 = vadd.s32 %v205, 1
    %v210 = vsel %vm208, %v209, %v205
    %v211 = vadd.s32 %v206, %v210
    %v212 = vadd.s32 %v211, 536870912
    %v213 = vshrl.u32 %v212, 30
    %v214 = vshll.u32 %v213, 30
    %v215 = vsub.s32 %v211, %v214
    %vm216 = vcmp.lt.s32.totalorder %v215, 0
    %v217 = vsub.s32 0, %v215
    %v218 = vsel %vm216, %v217, %v215
    %v219 = vclz %v218
    %v220 = vsub.s32 %v219, 2
    %vm221 = vcmp.gt.s32.totalorder 0, %v220
    %v222 = vsel %vm221, 0, %v220
    %v223 = vsub.s32 32, %v222
    %v224 = vshll.u32 %v215, %v222
    %v225 = vshrl.u32 %v207, %v223
    %v226 = vor.u32 %v224, %v225
    %v227 = vsub.s32 4294967266, %v222
    %v228 = vadd.s32 %v227, 127
    %v229 = vshll.u32 %v228, 23
    %v230 = vor.u32 4788187, %v229
    %v231 = vand.u32 2147483647, %v230
    %v233 = vcvt.s32.f32 %v226
    %v234 = vmul.f32 %v233, %v231
    %v235 = vxor.u32 %v234, 2147483648
    %v236 = vsel %vm153, %v235, %v234
    %v237 = vsub.s32 4, %v213
    %v238 = vsel %vm153, %v237, %v213
    %v239 = vsel %vm152, %v46, %v236
    %v240 = vsel %vm152, 0, %v238
    %v241 = vcosq.f32.pop %v239
    %v242 = vsinq.f32.pop %v239
    %vm243 = vweird.f32 %v46
    %v244 = vand.u32 %v240, 3
    %vm245 = vcmp.lt.s32.totalorder %v244, 2
    %vm246 = vcmp.eq.s32.totalorder %v244, 0
    %v247 = vxor.u32 %v242, 2147483648
    %v248 = vsel %vm246, %v241, %v247
    %vm249 = vcmp.eq.s32.totalorder %v244, 2
    %v250 = vxor.u32 %v241, 2147483648
    %v251 = vsel %vm249, %v250, %v242
    %v252 = vsel %vm245, %v248, %v251
    %v253 = vsel %vm243, nan, %v252
    %v254 = vld [vmem:[%s3] sm:$0xff]
    %v255 = vld [vmem:[%s3 + $0x8] sm:$0xff]
    %vm256 = vcmask 64512
    %v258 = vsel %vm256, %v253, 0
    %260 = vmatprep.subr.mxu0 0.0
    %261 = vmatpush1.msra.mxu0 0.0
    %262 = vmatprep.subr.mxu0 0.0
    %263 = vmatpush1.msra.mxu0 0.0
    %264 = vmatprep.subr.mxu0 0.0
    %265 = vmatpush1.msra.mxu0 0.0
    %266 = vmatprep.subr.mxu0 0.0
    %267 = vmatpush1.msra.mxu0 0.0
    %268 = vmatprep.subr.mxu0 0.0
    %269 = vmatpush1.msra.mxu0 0.0
    %270 = vmatprep.subr.mxu0 0.0
    %271 = vmatpush1.msra.mxu0 0.0
    %272 = vmatprep.subr.mxu0 0.0
    %273 = vmatpush1.msra.mxu0 0.0
    %274 = vmatprep.subr.mxu0 0.0
    %275 = vmatpush1.msra.mxu0 0.0
    %276 = vmatprep.subr.mxu0 0.0
    %277 = vmatpush1.msra.mxu0 0.0
    %278 = vmatprep.subr.mxu0 0.0
    %279 = vmatpush1.msra.mxu0 0.0
    %280 = vmatprep.subr.mxu0 0.0
    %281 = vmatpush1.msra.mxu0 0.0
    %282 = vmatprep.subr.mxu0 0.0
    %283 = vmatpush1.msra.mxu0 0.0
    %284 = vmatprep.subr.mxu0 0.0
    %285 = vmatpush1.msra.mxu0 0.0
    %286 = vmatprep.subr.mxu0 0.0
    %287 = vmatpush1.msra.mxu0 0.0
    %288 = vmatprep.subr.mxu0 0.0
    %289 = vmatpush1.msra.mxu0 0.0
    %290 = vmatprep.subr.mxu0 0.0
    %291 = vmatpush1.msra.mxu0 %v255
    %292 = vmatprep.subr.mxu0 0.0
    %293 = vmatpush2.msra.mxu0 0.0
    %294 = vmatprep.subr.mxu0 0.0
    %295 = vmatpush2.msra.mxu0 0.0
    %296 = vmatprep.subr.mxu0 0.0
    %297 = vmatpush2.msra.mxu0 0.0
    %298 = vmatprep.subr.mxu0 0.0
    %299 = vmatpush2.msra.mxu0 0.0
    %300 = vmatprep.subr.mxu0 0.0
    %301 = vmatpush2.msra.mxu0 0.0
    %302 = vmatprep.subr.mxu0 0.0
    %303 = vmatpush2.msra.mxu0 0.0
    %304 = vmatprep.subr.mxu0 0.0
    %305 = vmatpush2.msra.mxu0 0.0
    %306 = vmatprep.subr.mxu0 0.0
    %307 = vmatpush2.msra.mxu0 0.0
    %308 = vmatprep.subr.mxu0 0.0
    %309 = vmatpush2.msra.mxu0 0.0
    %310 = vmatprep.subr.mxu0 0.0
    %311 = vmatpush2.msra.mxu0 0.0
    %312 = vmatprep.subr.mxu0 0.0
    %313 = vmatpush2.msra.mxu0 0.0
    %314 = vmatprep.subr.mxu0 0.0
    %315 = vmatpush2.msra.mxu0 0.0
    %316 = vmatprep.subr.mxu0 0.0
    %317 = vmatpush2.msra.mxu0 0.0
    %318 = vmatprep.subr.mxu0 0.0
    %319 = vmatpush2.msra.mxu0 0.0
    %320 = vmatprep.subr.mxu0 0.0
    %321 = vmatpush2.msra.mxu0 0.0
    %322 = vmatprep.subr.mxu0 0.0
    %323 = vmatpush2.msra.mxu0 0.0
    %324 = vmatprep.mubr.f32.mxu0 0.0
    %325 = vmatmul.mubr.f32.gmra.mxu0 %v258
    %v326 = vpop.f32.mrf.mxu0
    %v327 = vadd.f32 0.0, %v326
    %v328 = vpop.f32.mrf.mxu0
    %329 = vdwg.mxu0
    %v331 = vsel %vm256, %v150, 0
    %333 = vmatprep.subr.mxu0 0.0
    %334 = vmatpush1.msra.mxu0 0.0
    %335 = vmatprep.subr.mxu0 0.0
    %336 = vmatpush1.msra.mxu0 0.0
    %337 = vmatprep.subr.mxu0 0.0
    %338 = vmatpush1.msra.mxu0 0.0
    %339 = vmatprep.subr.mxu0 0.0
    %340 = vmatpush1.msra.mxu0 0.0
    %341 = vmatprep.subr.mxu0 0.0
    %342 = vmatpush1.msra.mxu0 0.0
    %343 = vmatprep.subr.mxu0 0.0
    %344 = vmatpush1.msra.mxu0 0.0
    %345 = vmatprep.subr.mxu0 0.0
    %346 = vmatpush1.msra.mxu0 0.0
    %347 = vmatprep.subr.mxu0 0.0
    %348 = vmatpush1.msra.mxu0 0.0
    %349 = vmatprep.subr.mxu0 0.0
    %350 = vmatpush1.msra.mxu0 0.0
    %351 = vmatprep.subr.mxu0 0.0
    %352 = vmatpush1.msra.mxu0 0.0
    %353 = vmatprep.subr.mxu0 0.0
    %354 = vmatpush1.msra.mxu0 0.0
    %355 = vmatprep.subr.mxu0 0.0
    %356 = vmatpush1.msra.mxu0 0.0
    %357 = vmatprep.subr.mxu0 0.0
    %358 = vmatpush1.msra.mxu0 0.0
    %359 = vmatprep.subr.mxu0 0.0
    %360 = vmatpush1.msra.mxu0 0.0
    %361 = vmatprep.subr.mxu0 0.0
    %362 = vmatpush1.msra.mxu0 0.0
    %363 = vmatprep.subr.mxu0 0.0
    %364 = vmatpush1.msra.mxu0 %v254
    %365 = vmatprep.subr.mxu0 0.0
    %366 = vmatpush2.msra.mxu0 0.0
    %367 = vmatprep.subr.mxu0 0.0
    %368 = vmatpush2.msra.mxu0 0.0
    %369 = vmatprep.subr.mxu0 0.0
    %370 = vmatpush2.msra.mxu0 0.0
    %371 = vmatprep.subr.mxu0 0.0
    %372 = vmatpush2.msra.mxu0 0.0
    %373 = vmatprep.subr.mxu0 0.0
    %374 = vmatpush2.msra.mxu0 0.0
    %375 = vmatprep.subr.mxu0 0.0
    %376 = vmatpush2.msra.mxu0 0.0
    %377 = vmatprep.subr.mxu0 0.0
    %378 = vmatpush2.msra.mxu0 0.0
    %379 = vmatprep.subr.mxu0 0.0
    %380 = vmatpush2.msra.mxu0 0.0
    %381 = vmatprep.subr.mxu0 0.0
    %382 = vmatpush2.msra.mxu0 0.0
    %383 = vmatprep.subr.mxu0 0.0
    %384 = vmatpush2.msra.mxu0 0.0
    %385 = vmatprep.subr.mxu0 0.0
    %386 = vmatpush2.msra.mxu0 0.0
    %387 = vmatprep.subr.mxu0 0.0
    %388 = vmatpush2.msra.mxu0 0.0
    %389 = vmatprep.subr.mxu0 0.0
    %390 = vmatpush2.msra.mxu0 0.0
    %391 = vmatprep.subr.mxu0 0.0
    %392 = vmatpush2.msra.mxu0 0.0
    %393 = vmatprep.subr.mxu0 0.0
    %394 = vmatpush2.msra.mxu0 0.0
    %395 = vmatprep.subr.mxu0 0.0
    %396 = vmatpush2.msra.mxu0 0.0
    %397 = vmatprep.mubr.f32.mxu0 0.0
    %398 = vmatmul.mubr.f32.gmra.mxu0 %v331
    %v399 = vpop.f32.mrf.mxu0
    %v400 = vadd.f32 %v327, %v399
    %v401 = vpop.f32.mrf.mxu0
    %402 = vdwg.mxu0
    %v403 = vld [vmem:[%s3 + $0x30] sm:$0x1]
    %v404 = vlaneseq
    %v405 = vshrl.u32 %v404, 7
    %v406 = vsub.s32 0, %v405
    %v407 = vrot.slane %v403, %v406
    %v408 = vadd.f32 %v400, %v407
    %v409 = vmin.f32 %v408, 25.0
    %v410 = vmul.f32 %v409, 1.442695
    %v411 = vpow.pop %v410
    %v412 = vadd.f32 %v411, 1.0
    %v413 = vmul.f32 %v412, %v412
    %v414 = vadd.f32 %v413, 1.0
    %v415 = vrcp.pop %v414
    %v416 = vmul.f32 %v415, 2.0
    %v417 = vsub.f32 1.0, %v416
    %v418 = vmul.f32 %v408, %v417
    %v419 = vld [vmem:[%s3 + $0x10] sm:$0xff]
    %v420 = vld [vmem:[%s3 + $0x18] sm:$0xff]
    %v421 = vld [vmem:[%s3 + $0x20] sm:$0xff]
    %v422 = vld [vmem:[%s3 + $0x28] sm:$0xff]
    %v423 = vld [vmem:[%s3 + $0x31] sm:$0x1]
    %v424 = vlaneseq
    %v425 = vshrl.u32 %v424, 7
    %v426 = vsub.s32 0, %v425
    %v427 = vrot.slane %v423, %v426
    %vm428 = vcmask 261120
    %v430 = vsel %vm428, %v418, 0
    %432 = vmatprep.subr.mxu0 0.0
    %433 = vmatpush1.msra.mxu0 0.0
    %434 = vmatprep.subr.mxu0 0.0
    %435 = vmatpush1.msra.mxu0 0.0
    %436 = vmatprep.subr.mxu0 0.0
    %437 = vmatpush1.msra.mxu0 0.0
    %438 = vmatprep.subr.mxu0 0.0
    %439 = vmatpush1.msra.mxu0 0.0
    %440 = vmatprep.subr.mxu0 0.0
    %441 = vmatpush1.msra.mxu0 0.0
    %442 = vmatprep.subr.mxu0 0.0
    %443 = vmatpush1.msra.mxu0 0.0
    %444 = vmatprep.subr.mxu0 0.0
    %445 = vmatpush1.msra.mxu0 0.0
    %446 = vmatprep.subr.mxu0 0.0
    %447 = vmatpush1.msra.mxu0 0.0
    %448 = vmatprep.subr.mxu0 0.0
    %449 = vmatpush1.msra.mxu0 0.0
    %450 = vmatprep.subr.mxu0 0.0
    %451 = vmatpush1.msra.mxu0 0.0
    %452 = vmatprep.subr.mxu0 0.0
    %453 = vmatpush1.msra.mxu0 0.0
    %454 = vmatprep.subr.mxu0 0.0
    %455 = vmatpush1.msra.mxu0 0.0
    %456 = vmatprep.subr.mxu0 0.0
    %457 = vmatpush1.msra.mxu0 %v422
    %458 = vmatprep.subr.mxu0 0.0
    %459 = vmatpush1.msra.mxu0 %v421
    %460 = vmatprep.subr.mxu0 0.0
    %461 = vmatpush1.msra.mxu0 %v420
    %462 = vmatprep.subr.mxu0 0.0
    %463 = vmatpush1.msra.mxu0 %v419
    %464 = vmatprep.subr.mxu0 0.0
    %465 = vmatpush2.msra.mxu0 0.0
    %466 = vmatprep.subr.mxu0 0.0
    %467 = vmatpush2.msra.mxu0 0.0
    %468 = vmatprep.subr.mxu0 0.0
    %469 = vmatpush2.msra.mxu0 0.0
    %470 = vmatprep.subr.mxu0 0.0
    %471 = vmatpush2.msra.mxu0 0.0
    %472 = vmatprep.subr.mxu0 0.0
    %473 = vmatpush2.msra.mxu0 0.0
    %474 = vmatprep.subr.mxu0 0.0
    %475 = vmatpush2.msra.mxu0 0.0
    %476 = vmatprep.subr.mxu0 0.0
    %477 = vmatpush2.msra.mxu0 0.0
    %478 = vmatprep.subr.mxu0 0.0
    %479 = vmatpush2.msra.mxu0 0.0
    %480 = vmatprep.subr.mxu0 0.0
    %481 = vmatpush2.msra.mxu0 0.0
    %482 = vmatprep.subr.mxu0 0.0
    %483 = vmatpush2.msra.mxu0 0.0
    %484 = vmatprep.subr.mxu0 0.0
    %485 = vmatpush2.msra.mxu0 0.0
    %486 = vmatprep.subr.mxu0 0.0
    %487 = vmatpush2.msra.mxu0 0.0
    %488 = vmatprep.subr.mxu0 0.0
    %489 = vmatpush2.msra.mxu0 0.0
    %490 = vmatprep.subr.mxu0 0.0
    %491 = vmatpush2.msra.mxu0 0.0
    %492 = vmatprep.subr.mxu0 0.0
    %493 = vmatpush2.msra.mxu0 0.0
    %494 = vmatprep.subr.mxu0 0.0
    %495 = vmatpush2.msra.mxu0 0.0
    %496 = vmatprep.mubr.f32.mxu0 0.0
    %497 = vmatmul.mubr.f32.gmra.mxu0 %v430
    %v498 = vpop.f32.mrf.mxu0
    %v499 = vadd.f32 %v427, %v498
    %v500 = vpop.f32.mrf.mxu0
    %501 = vdwg.mxu0
    %v502 = vld [vmem:[#allocation2] sm:$0x7]
    %v503 = vld [vmem:[#allocation2 + $0x8] sm:$0x7]
    %v504 = vld [vmem:[#allocation2] sm:$0xf8]
    %v505 = vld [vmem:[#allocation2 + $0x8] sm:$0xf8]
    %v506 = vld [vmem:[#allocation2 + $0x10] sm:$0xff]
    %v507 = vld [vmem:[#allocation2 + $0x18] sm:$0xff]
    %v508 = vld [vmem:[#allocation2 + $0x20] sm:$0x7]
    %v509 = vld [vmem:[#allocation2 + $0x28] sm:$0x7]
    %v510 = vld [vmem:[#allocation2 + $0x20] sm:$0xf8]
    %v511 = vld [vmem:[#allocation2 + $0x28] sm:$0xf8]
    %v512 = vld [vmem:[#allocation2 + $0x30] sm:$0x3f]
    %v513 = vld [vmem:[#allocation2 + $0x38] sm:$0x3f]
    %v514 = vld [vmem:[%s1] sm:$0xff]
    %vm521 = vcmask 1044480
    %v522 = vrot.slane %v504, 3
    %v523 = vrot.slane %v506, 3
    %v524 = vsel %vm521, %v522, %v523
    %v525 = vrot.slane %v505, 3
    %v526 = vrot.slane %v507, 3
    %v527 = vsel %vm521, %v525, %v526
    %v528 = vrot.slane %v508, 3
    %v529 = vsel %vm521, %v523, %v528
    %v530 = vrot.slane %v509, 3
    %v531 = vsel %vm521, %v526, %v530
    %vm536 = vcmask 130048
    %v538 = vsel %vm536, %v499, 0
    %540 = vmatprep.subr.mxu0 0.0
    %541 = vmatpush1.msra.mxu0 0.0
    %542 = vmatprep.subr.mxu0 0.0
    %543 = vmatpush1.msra.mxu0 0.0
    %544 = vmatprep.subr.mxu0 0.0
    %545 = vmatpush1.msra.mxu0 0.0
    %546 = vmatprep.subr.mxu0 0.0
    %547 = vmatpush1.msra.mxu0 0.0
    %548 = vmatprep.subr.mxu0 0.0
    %549 = vmatpush1.msra.mxu0 0.0
    %550 = vmatprep.subr.mxu0 0.0
    %551 = vmatpush1.msra.mxu0 0.0
    %552 = vmatprep.subr.mxu0 0.0
    %553 = vmatpush1.msra.mxu0 0.0
    %554 = vmatprep.subr.mxu0 0.0
    %555 = vmatpush1.msra.mxu0 0.0
    %556 = vmatprep.subr.mxu0 0.0
    %557 = vmatpush1.msra.mxu0 0.0
    %558 = vmatprep.subr.mxu0 0.0
    %559 = vmatpush1.msra.mxu0 0.0
    %560 = vmatprep.subr.mxu0 0.0
    %561 = vmatpush1.msra.mxu0 0.0
    %562 = vmatprep.subr.mxu0 0.0
    %563 = vmatpush1.msra.mxu0 0.0
    %564 = vmatprep.subr.mxu0 0.0
    %565 = vmatpush1.msra.mxu0 0.0
    %566 = vmatprep.subr.mxu0 0.0
    %567 = vmatpush1.msra.mxu0 0.0
    %568 = vmatprep.subr.mxu0 %v531
    %569 = vmatpush1.msra.mxu0 %v529
    %570 = vmatprep.subr.mxu0 %v527
    %571 = vmatpush1.msra.mxu0 %v524
    %572 = vmatprep.subr.mxu0 0.0
    %573 = vmatpush2.msra.mxu0 0.0
    %574 = vmatprep.subr.mxu0 0.0
    %575 = vmatpush2.msra.mxu0 0.0
    %576 = vmatprep.subr.mxu0 0.0
    %577 = vmatpush2.msra.mxu0 0.0
    %578 = vmatprep.subr.mxu0 0.0
    %579 = vmatpush2.msra.mxu0 0.0
    %580 = vmatprep.subr.mxu0 0.0
    %581 = vmatpush2.msra.mxu0 0.0
    %582 = vmatprep.subr.mxu0 0.0
    %583 = vmatpush2.msra.mxu0 0.0
    %584 = vmatprep.subr.mxu0 0.0
    %585 = vmatpush2.msra.mxu0 0.0
    %586 = vmatprep.subr.mxu0 0.0
    %587 = vmatpush2.msra.mxu0 0.0
    %588 = vmatprep.subr.mxu0 0.0
    %589 = vmatpush2.msra.mxu0 0.0
    %590 = vmatprep.subr.mxu0 0.0
    %591 = vmatpush2.msra.mxu0 0.0
    %592 = vmatprep.subr.mxu0 0.0
    %593 = vmatpush2.msra.mxu0 0.0
    %594 = vmatprep.subr.mxu0 0.0
    %595 = vmatpush2.msra.mxu0 0.0
    %596 = vmatprep.subr.mxu0 0.0
    %597 = vmatpush2.msra.mxu0 0.0
    %598 = vmatprep.subr.mxu0 0.0
    %599 = vmatpush2.msra.mxu0 0.0
    %600 = vmatprep.subr.mxu0 0.0
    %601 = vmatpush2.msra.mxu0 0.0
    %602 = vmatprep.subr.mxu0 0.0
    %603 = vmatpush2.msra.mxu0 0.0
    %604 = vmatprep.mubr.f32.mxu0 0.0
    %605 = vmatmul.mubr.f32.gmra.mxu0 %v538
    %v606 = vpop.f32.mrf.mxu0
    %v607 = vadd.f32 0.0, %v606
    %v608 = vpop.f32.mrf.mxu0
    %v609 = vadd.f32 0.0, %v608
    %610 = vdwg.mxu0
    %vm611 = vcmask 23552
    %v613 = vsel %vm611, %v514, 0
    %vm615 = vcmask 1042432
    %v617 = vsel %vm615, %v502, 0
    %v620 = vsel %vm615, %v503, 0
    %622 = vmatprep.subr.mxu0 0.0
    %623 = vmatpush1.msra.mxu0 0.0
    %624 = vmatprep.subr.mxu0 0.0
    %625 = vmatpush1.msra.mxu0 0.0
    %626 = vmatprep.subr.mxu0 0.0
    %627 = vmatpush1.msra.mxu0 0.0
    %628 = vmatprep.subr.mxu0 0.0
    %629 = vmatpush1.msra.mxu0 0.0
    %630 = vmatprep.subr.mxu0 0.0
    %631 = vmatpush1.msra.mxu0 0.0
    %632 = vmatprep.subr.mxu0 0.0
    %633 = vmatpush1.msra.mxu0 0.0
    %634 = vmatprep.subr.mxu0 0.0
    %635 = vmatpush1.msra.mxu0 0.0
    %636 = vmatprep.subr.mxu0 0.0
    %637 = vmatpush1.msra.mxu0 0.0
    %638 = vmatprep.subr.mxu0 0.0
    %639 = vmatpush1.msra.mxu0 0.0
    %640 = vmatprep.subr.mxu0 0.0
    %641 = vmatpush1.msra.mxu0 0.0
    %642 = vmatprep.subr.mxu0 0.0
    %643 = vmatpush1.msra.mxu0 0.0
    %644 = vmatprep.subr.mxu0 0.0
    %645 = vmatpush1.msra.mxu0 0.0
    %646 = vmatprep.subr.mxu0 0.0
    %647 = vmatpush1.msra.mxu0 0.0
    %648 = vmatprep.subr.mxu0 0.0
    %649 = vmatpush1.msra.mxu0 0.0
    %650 = vmatprep.subr.mxu0 0.0
    %651 = vmatpush1.msra.mxu0 0.0
    %652 = vmatprep.subr.mxu0 %v620
    %653 = vmatpush1.msra.mxu0 %v617
    %654 = vmatprep.subr.mxu0 0.0
    %655 = vmatpush2.msra.mxu0 0.0
    %656 = vmatprep.subr.mxu0 0.0
    %657 = vmatpush2.msra.mxu0 0.0
    %658 = vmatprep.subr.mxu0 0.0
    %659 = vmatpush2.msra.mxu0 0.0
    %660 = vmatprep.subr.mxu0 0.0
    %661 = vmatpush2.msra.mxu0 0.0
    %662 = vmatprep.subr.mxu0 0.0
    %663 = vmatpush2.msra.mxu0 0.0
    %664 = vmatprep.subr.mxu0 0.0
    %665 = vmatpush2.msra.mxu0 0.0
    %666 = vmatprep.subr.mxu0 0.0
    %667 = vmatpush2.msra.mxu0 0.0
    %668 = vmatprep.subr.mxu0 0.0
    %669 = vmatpush2.msra.mxu0 0.0
    %670 = vmatprep.subr.mxu0 0.0
    %671 = vmatpush2.msra.mxu0 0.0
    %672 = vmatprep.subr.mxu0 0.0
    %673 = vmatpush2.msra.mxu0 0.0
    %674 = vmatprep.subr.mxu0 0.0
    %675 = vmatpush2.msra.mxu0 0.0
    %676 = vmatprep.subr.mxu0 0.0
    %677 = vmatpush2.msra.mxu0 0.0
    %678 = vmatprep.subr.mxu0 0.0
    %679 = vmatpush2.msra.mxu0 0.0
    %680 = vmatprep.subr.mxu0 0.0
    %681 = vmatpush2.msra.mxu0 0.0
    %682 = vmatprep.subr.mxu0 0.0
    %683 = vmatpush2.msra.mxu0 0.0
    %684 = vmatprep.subr.mxu0 0.0
    %685 = vmatpush2.msra.mxu0 0.0
    %686 = vmatprep.mubr.f32.mxu0 0.0
    %687 = vmatmul.mubr.f32.gmra.mxu0 %v613
    %v688 = vpop.f32.mrf.mxu0
    %v689 = vadd.f32 %v607, %v688
    %v690 = vpop.f32.mrf.mxu0
    %v691 = vadd.f32 %v609, %v690
    %692 = vdwg.mxu0
    %v693 = vld [vmem:[%s2] sm:$0xff]
    %v698 = vrot.slane %v510, 3
    %v699 = vrot.slane %v512, 3
    %v700 = vsel %vm521, %v698, %v699
    %v701 = vrot.slane %v511, 3
    %v702 = vrot.slane %v513, 3
    %v703 = vsel %vm521, %v701, %v702
    %vm706 = vcmask 89088
    %v708 = vsel %vm706, %v693, 0
    %v710 = vsel %vm615, %v699, 0
    %v712 = vsel %vm615, %v702, 0
    %714 = vmatprep.subr.mxu0 0.0
    %715 = vmatpush1.msra.mxu0 0.0
    %716 = vmatprep.subr.mxu0 0.0
    %717 = vmatpush1.msra.mxu0 0.0
    %718 = vmatprep.subr.mxu0 0.0
    %719 = vmatpush1.msra.mxu0 0.0
    %720 = vmatprep.subr.mxu0 0.0
    %721 = vmatpush1.msra.mxu0 0.0
    %722 = vmatprep.subr.mxu0 0.0
    %723 = vmatpush1.msra.mxu0 0.0
    %724 = vmatprep.subr.mxu0 0.0
    %725 = vmatpush1.msra.mxu0 0.0
    %726 = vmatprep.subr.mxu0 0.0
    %727 = vmatpush1.msra.mxu0 0.0
    %728 = vmatprep.subr.mxu0 0.0
    %729 = vmatpush1.msra.mxu0 0.0
    %730 = vmatprep.subr.mxu0 0.0
    %731 = vmatpush1.msra.mxu0 0.0
    %732 = vmatprep.subr.mxu0 0.0
    %733 = vmatpush1.msra.mxu0 0.0
    %734 = vmatprep.subr.mxu0 0.0
    %735 = vmatpush1.msra.mxu0 0.0
    %736 = vmatprep.subr.mxu0 0.0
    %737 = vmatpush1.msra.mxu0 0.0
    %738 = vmatprep.subr.mxu0 0.0
    %739 = vmatpush1.msra.mxu0 0.0
    %740 = vmatprep.subr.mxu0 0.0
    %741 = vmatpush1.msra.mxu0 0.0
    %742 = vmatprep.subr.mxu0 %v712
    %743 = vmatpush1.msra.mxu0 %v710
    %744 = vmatprep.subr.mxu0 %v703
    %745 = vmatpush1.msra.mxu0 %v700
    %746 = vmatprep.subr.mxu0 0.0
    %747 = vmatpush2.msra.mxu0 0.0
    %748 = vmatprep.subr.mxu0 0.0
    %749 = vmatpush2.msra.mxu0 0.0
    %750 = vmatprep.subr.mxu0 0.0
    %751 = vmatpush2.msra.mxu0 0.0
    %752 = vmatprep.subr.mxu0 0.0
    %753 = vmatpush2.msra.mxu0 0.0
    %754 = vmatprep.subr.mxu0 0.0
    %755 = vmatpush2.msra.mxu0 0.0
    %756 = vmatprep.subr.mxu0 0.0
    %757 = vmatpush2.msra.mxu0 0.0
    %758 = vmatprep.subr.mxu0 0.0
    %759 = vmatpush2.msra.mxu0 0.0
    %760 = vmatprep.subr.mxu0 0.0
    %761 = vmatpush2.msra.mxu0 0.0
    %762 = vmatprep.subr.mxu0 0.0
    %763 = vmatpush2.msra.mxu0 0.0
    %764 = vmatprep.subr.mxu0 0.0
    %765 = vmatpush2.msra.mxu0 0.0
    %766 = vmatprep.subr.mxu0 0.0
    %767 = vmatpush2.msra.mxu0 0.0
    %768 = vmatprep.subr.mxu0 0.0
    %769 = vmatpush2.msra.mxu0 0.0
    %770 = vmatprep.subr.mxu0 0.0
    %771 = vmatpush2.msra.mxu0 0.0
    %772 = vmatprep.subr.mxu0 0.0
    %773 = vmatpush2.msra.mxu0 0.0
    %774 = vmatprep.subr.mxu0 0.0
    %775 = vmatpush2.msra.mxu0 0.0
    %776 = vmatprep.subr.mxu0 0.0
    %777 = vmatpush2.msra.mxu0 0.0
    %778 = vmatprep.mubr.f32.mxu0 0.0
    %779 = vmatmul.mubr.f32.gmra.mxu0 %v708
    %v780 = vpop.f32.mrf.mxu0
    %v781 = vadd.f32 0.0, %v780
    %v782 = vpop.f32.mrf.mxu0
    %v783 = vadd.f32 0.0, %v782
    %784 = vdwg.mxu0
    %v785 = vadd.f32 %v689, %v781
    %v786 = vadd.f32 %v691, %v783
    %s787 = scalar_lea.vmem [#allocation2], 1600
    %v788 = vld [vmem:[%s787] ss:$8 sm:$0x3]
    %v790 = vlaneseq
    %v791 = vshrl.u32 %v790, 7
    %v792 = vsub.s32 0, %v791
    %v793 = vrot.slane %v788, %v792
    %v794 = vlaneseq
    %v795 = vshrl.u32 %v794, 7
    %v796 = vsub.s32 1, %v795
    %v797 = vrot.slane %v788, %v796
    %v800 = vadd.f32 %v785, %v793
    %v801 = vadd.f32 %v786, %v797
    %v802 = vmin.f32 %v800, 25.0
    %v803 = vmin.f32 %v801, 25.0
    %v804 = vmul.f32 %v802, 1.442695
    %v805 = vpow.pop %v804
    %v806 = vmul.f32 %v803, 1.442695
    %v807 = vpow.pop %v806
    %v808 = vadd.f32 %v805, 1.0
    %v809 = vadd.f32 %v807, 1.0
    %v810 = vmul.f32 %v808, %v808
    %v811 = vmul.f32 %v809, %v809
    %v812 = vadd.f32 %v810, 1.0
    %v813 = vadd.f32 %v811, 1.0
    %v814 = vrcp.pop %v812
    %v815 = vrcp.pop %v813
    %v816 = vmul.f32 %v814, 2.0
    %v817 = vmul.f32 %v815, 2.0
    %v818 = vsub.f32 1.0, %v816
    %v819 = vsub.f32 1.0, %v817
    %v820 = vmul.f32 %v800, %v818
    %v821 = vmul.f32 %v801, %v819
    %v822 = vld [vmem:[#allocation2 + $0x40] sm:$0xff]
    %v823 = vld [vmem:[#allocation2 + $0x48] sm:$0xff]
    %v824 = vld [vmem:[#allocation2 + $0x50] sm:$0xff]
    %v825 = vld [vmem:[#allocation2 + $0x58] sm:$0xff]
    %v826 = vld [vmem:[#allocation2 + $0x60] sm:$0xff]
    %v827 = vld [vmem:[#allocation2 + $0x68] sm:$0xff]
    %v828 = vld [vmem:[#allocation2 + $0x70] sm:$0xff]
    %v829 = vld [vmem:[#allocation2 + $0x78] sm:$0xff]
    %v830 = vld [vmem:[#allocation2 + $0x80] sm:$0xff]
    %v831 = vld [vmem:[#allocation2 + $0x88] sm:$0xff]
    %v832 = vld [vmem:[#allocation2 + $0x90] sm:$0xff]
    %v833 = vld [vmem:[#allocation2 + $0x98] sm:$0xff]
    %v834 = vld [vmem:[#allocation2 + $0xa0] sm:$0xff]
    %v835 = vld [vmem:[#allocation2 + $0xa8] sm:$0xff]
    %v836 = vld [vmem:[#allocation2 + $0xb0] sm:$0xff]
    %v837 = vld [vmem:[#allocation2 + $0xb8] sm:$0xff]
    %v838 = vld [vmem:[#allocation2 + $0xc0] sm:$0xff]
    %v839 = vld [vmem:[#allocation2 + $0xc8] sm:$0xff]
    %v840 = vld [vmem:[#allocation2 + $0xd0] sm:$0xff]
    %v841 = vld [vmem:[#allocation2 + $0xd8] sm:$0xff]
    %v842 = vld [vmem:[#allocation2 + $0xe0] sm:$0xff]
    %v843 = vld [vmem:[#allocation2 + $0xe8] sm:$0xff]
    %v844 = vld [vmem:[#allocation2 + $0xf0] sm:$0xff]
    %v845 = vld [vmem:[#allocation2 + $0xf8] sm:$0xff]
    %v846 = vld [vmem:[#allocation2 + $0x100] sm:$0xff]
    %v847 = vld [vmem:[#allocation2 + $0x108] sm:$0xff]
    %v848 = vld [vmem:[#allocation2 + $0x110] sm:$0xff]
    %v849 = vld [vmem:[#allocation2 + $0x118] sm:$0xff]
    %v850 = vld [vmem:[#allocation2 + $0x120] sm:$0xff]
    %v851 = vld [vmem:[#allocation2 + $0x128] sm:$0xff]
    %v852 = vld [vmem:[#allocation2 + $0x130] sm:$0xff]
    %v853 = vld [vmem:[#allocation2 + $0x138] sm:$0xff]
    %v854 = vld [vmem:[#allocation2 + $0x140] sm:$0xff]
    %v855 = vld [vmem:[#allocation2 + $0x148] sm:$0xff]
    %v856 = vld [vmem:[#allocation2 + $0x150] sm:$0xff]
    %v857 = vld [vmem:[#allocation2 + $0x158] sm:$0xff]
    %v858 = vld [vmem:[#allocation2 + $0x160] sm:$0xff]
    %v859 = vld [vmem:[#allocation2 + $0x168] sm:$0xff]
    %v860 = vld [vmem:[#allocation2 + $0x170] sm:$0xff]
    %v861 = vld [vmem:[#allocation2 + $0x178] sm:$0xff]
    %v862 = vld [vmem:[#allocation2 + $0x180] sm:$0xff]
    %v863 = vld [vmem:[#allocation2 + $0x188] sm:$0xff]
    %v864 = vld [vmem:[#allocation2 + $0x190] sm:$0xff]
    %v865 = vld [vmem:[#allocation2 + $0x198] sm:$0xff]
    %v866 = vld [vmem:[#allocation2 + $0x1a0] sm:$0xff]
    %v867 = vld [vmem:[#allocation2 + $0x1a8] sm:$0xff]
    %v868 = vld [vmem:[#allocation2 + $0x1b0] sm:$0xff]
    %v869 = vld [vmem:[#allocation2 + $0x1b8] sm:$0xff]
    %v870 = vld [vmem:[#allocation2 + $0x1c0] sm:$0xff]
    %v871 = vld [vmem:[#allocation2 + $0x1c8] sm:$0xff]
    %v872 = vld [vmem:[#allocation2 + $0x1d0] sm:$0xff]
    %v873 = vld [vmem:[#allocation2 + $0x1d8] sm:$0xff]
    %v874 = vld [vmem:[#allocation2 + $0x1e0] sm:$0xff]
    %v875 = vld [vmem:[#allocation2 + $0x1e8] sm:$0xff]
    %v876 = vld [vmem:[#allocation2 + $0x1f0] sm:$0xff]
    %v877 = vld [vmem:[#allocation2 + $0x1f8] sm:$0xff]
    %v878 = vld [vmem:[#allocation2 + $0x200] sm:$0xff]
    %v879 = vld [vmem:[#allocation2 + $0x208] sm:$0xff]
    %v880 = vld [vmem:[#allocation2 + $0x210] sm:$0xff]
    %v881 = vld [vmem:[#allocation2 + $0x218] sm:$0xff]
    %v882 = vld [vmem:[#allocation2 + $0x220] sm:$0xff]
    %v883 = vld [vmem:[#allocation2 + $0x228] sm:$0xff]
    %v884 = vld [vmem:[#allocation2 + $0x230] sm:$0xff]
    %v885 = vld [vmem:[#allocation2 + $0x238] sm:$0xff]
    %s886 = scalar_lea.vmem [#allocation2], 1601
    %v887 = vld [vmem:[%s886] ss:$8 sm:$0x3]
    %v889 = vlaneseq
    %v890 = vshrl.u32 %v889, 7
    %v891 = vsub.s32 0, %v890
    %v892 = vrot.slane %v887, %v891
    %v893 = vlaneseq
    %v894 = vshrl.u32 %v893, 7
    %v895 = vsub.s32 1, %v894
    %v896 = vrot.slane %v887, %v895
    %899 = vmatprep.subr.mxu0 %v853
    %900 = vmatpush1.msra.mxu0 %v852
    %901 = vmatprep.subr.mxu0 %v851
    %902 = vmatpush1.msra.mxu0 %v850
    %903 = vmatprep.subr.mxu0 %v849
    %904 = vmatpush1.msra.mxu0 %v848
    %905 = vmatprep.subr.mxu0 %v847
    %906 = vmatpush1.msra.mxu0 %v846
    %907 = vmatprep.subr.mxu0 %v845
    %908 = vmatpush1.msra.mxu0 %v844
    %909 = vmatprep.subr.mxu0 %v843
    %910 = vmatpush1.msra.mxu0 %v842
    %911 = vmatprep.subr.mxu0 %v841
    %912 = vmatpush1.msra.mxu0 %v840
    %913 = vmatprep.subr.mxu0 %v839
    %914 = vmatpush1.msra.mxu0 %v838
    %915 = vmatprep.subr.mxu0 %v837
    %916 = vmatpush1.msra.mxu0 %v836
    %917 = vmatprep.subr.mxu0 %v835
    %918 = vmatpush1.msra.mxu0 %v834
    %919 = vmatprep.subr.mxu0 %v833
    %920 = vmatpush1.msra.mxu0 %v832
    %921 = vmatprep.subr.mxu0 %v831
    %922 = vmatpush1.msra.mxu0 %v830
    %923 = vmatprep.subr.mxu0 %v829
    %924 = vmatpush1.msra.mxu0 %v828
    %925 = vmatprep.subr.mxu0 %v827
    %926 = vmatpush1.msra.mxu0 %v826
    %927 = vmatprep.subr.mxu0 %v825
    %928 = vmatpush1.msra.mxu0 %v824
    %929 = vmatprep.subr.mxu0 %v823
    %930 = vmatpush1.msra.mxu0 %v822
    %931 = vmatprep.subr.mxu0 %v885
    %932 = vmatpush2.msra.mxu0 %v884
    %933 = vmatprep.subr.mxu0 %v883
    %934 = vmatpush2.msra.mxu0 %v882
    %935 = vmatprep.subr.mxu0 %v881
    %936 = vmatpush2.msra.mxu0 %v880
    %937 = vmatprep.subr.mxu0 %v879
    %938 = vmatpush2.msra.mxu0 %v878
    %939 = vmatprep.subr.mxu0 %v877
    %940 = vmatpush2.msra.mxu0 %v876
    %941 = vmatprep.subr.mxu0 %v875
    %942 = vmatpush2.msra.mxu0 %v874
    %943 = vmatprep.subr.mxu0 %v873
    %944 = vmatpush2.msra.mxu0 %v872
    %945 = vmatprep.subr.mxu0 %v871
    %946 = vmatpush2.msra.mxu0 %v870
    %947 = vmatprep.subr.mxu0 %v869
    %948 = vmatpush2.msra.mxu0 %v868
    %949 = vmatprep.subr.mxu0 %v867
    %950 = vmatpush2.msra.mxu0 %v866
    %951 = vmatprep.subr.mxu0 %v865
    %952 = vmatpush2.msra.mxu0 %v864
    %953 = vmatprep.subr.mxu0 %v863
    %954 = vmatpush2.msra.mxu0 %v862
    %955 = vmatprep.subr.mxu0 %v861
    %956 = vmatpush2.msra.mxu0 %v860
    %957 = vmatprep.subr.mxu0 %v859
    %958 = vmatpush2.msra.mxu0 %v858
    %959 = vmatprep.subr.mxu0 %v857
    %960 = vmatpush2.msra.mxu0 %v856
    %961 = vmatprep.subr.mxu0 %v855
    %962 = vmatpush2.msra.mxu0 %v854
    %963 = vmatprep.mubr.f32.mxu0 %v821
    %964 = vmatmul.mubr.f32.gmra.mxu0 %v820
    %v965 = vpop.f32.mrf.mxu0
    %v966 = vadd.f32 %v892, %v965
    %v967 = vpop.f32.mrf.mxu0
    %v968 = vadd.f32 %v896, %v967
    %969 = vdwg.mxu0
    %v970 = vmin.f32 %v966, 25.0
    %v971 = vmin.f32 %v968, 25.0
    %v972 = vmul.f32 %v970, 1.442695
    %v973 = vpow.pop %v972
    %v974 = vmul.f32 %v971, 1.442695
    %v975 = vpow.pop %v974
    %v976 = vadd.f32 %v973, 1.0
    %v977 = vadd.f32 %v975, 1.0
    %v978 = vmul.f32 %v976, %v976
    %v979 = vmul.f32 %v977, %v977
    %v980 = vadd.f32 %v978, 1.0
    %v981 = vadd.f32 %v979, 1.0
    %v982 = vrcp.pop %v980
    %v983 = vrcp.pop %v981
    %v984 = vmul.f32 %v982, 2.0
    %v985 = vmul.f32 %v983, 2.0
    %v986 = vsub.f32 1.0, %v984
    %v987 = vsub.f32 1.0, %v985
    %v988 = vmul.f32 %v966, %v986
    %v989 = vmul.f32 %v968, %v987
    %v990 = vld [vmem:[#allocation2 + $0x240] sm:$0xff]
    %v991 = vld [vmem:[#allocation2 + $0x248] sm:$0xff]
    %v992 = vld [vmem:[#allocation2 + $0x250] sm:$0xff]
    %v993 = vld [vmem:[#allocation2 + $0x258] sm:$0xff]
    %v994 = vld [vmem:[#allocation2 + $0x260] sm:$0xff]
    %v995 = vld [vmem:[#allocation2 + $0x268] sm:$0xff]
    %v996 = vld [vmem:[#allocation2 + $0x270] sm:$0xff]
    %v997 = vld [vmem:[#allocation2 + $0x278] sm:$0xff]
    %v998 = vld [vmem:[#allocation2 + $0x280] sm:$0xff]
    %v999 = vld [vmem:[#allocation2 + $0x288] sm:$0xff]
    %v1000 = vld [vmem:[#allocation2 + $0x290] sm:$0xff]
    %v1001 = vld [vmem:[#allocation2 + $0x298] sm:$0xff]
    %v1002 = vld [vmem:[#allocation2 + $0x2a0] sm:$0xff]
    %v1003 = vld [vmem:[#allocation2 + $0x2a8] sm:$0xff]
    %v1004 = vld [vmem:[#allocation2 + $0x2b0] sm:$0xff]
    %v1005 = vld [vmem:[#allocation2 + $0x2b8] sm:$0xff]
    %v1006 = vld [vmem:[#allocation2 + $0x2c0] sm:$0xff]
    %v1007 = vld [vmem:[#allocation2 + $0x2c8] sm:$0xff]
    %v1008 = vld [vmem:[#allocation2 + $0x2d0] sm:$0xff]
    %v1009 = vld [vmem:[#allocation2 + $0x2d8] sm:$0xff]
    %v1010 = vld [vmem:[#allocation2 + $0x2e0] sm:$0xff]
    %v1011 = vld [vmem:[#allocation2 + $0x2e8] sm:$0xff]
    %v1012 = vld [vmem:[#allocation2 + $0x2f0] sm:$0xff]
    %v1013 = vld [vmem:[#allocation2 + $0x2f8] sm:$0xff]
    %v1014 = vld [vmem:[#allocation2 + $0x300] sm:$0xff]
    %v1015 = vld [vmem:[#allocation2 + $0x308] sm:$0xff]
    %v1016 = vld [vmem:[#allocation2 + $0x310] sm:$0xff]
    %v1017 = vld [vmem:[#allocation2 + $0x318] sm:$0xff]
    %v1018 = vld [vmem:[#allocation2 + $0x320] sm:$0xff]
    %v1019 = vld [vmem:[#allocation2 + $0x328] sm:$0xff]
    %v1020 = vld [vmem:[#allocation2 + $0x330] sm:$0xff]
    %v1021 = vld [vmem:[#allocation2 + $0x338] sm:$0xff]
    %v1022 = vld [vmem:[#allocation2 + $0x340] sm:$0xff]
    %v1023 = vld [vmem:[#allocation2 + $0x348] sm:$0xff]
    %v1024 = vld [vmem:[#allocation2 + $0x350] sm:$0xff]
    %v1025 = vld [vmem:[#allocation2 + $0x358] sm:$0xff]
    %v1026 = vld [vmem:[#allocation2 + $0x360] sm:$0xff]
    %v1027 = vld [vmem:[#allocation2 + $0x368] sm:$0xff]
    %v1028 = vld [vmem:[#allocation2 + $0x370] sm:$0xff]
    %v1029 = vld [vmem:[#allocation2 + $0x378] sm:$0xff]
    %v1030 = vld [vmem:[#allocation2 + $0x380] sm:$0xff]
    %v1031 = vld [vmem:[#allocation2 + $0x388] sm:$0xff]
    %v1032 = vld [vmem:[#allocation2 + $0x390] sm:$0xff]
    %v1033 = vld [vmem:[#allocation2 + $0x398] sm:$0xff]
    %v1034 = vld [vmem:[#allocation2 + $0x3a0] sm:$0xff]
    %v1035 = vld [vmem:[#allocation2 + $0x3a8] sm:$0xff]
    %v1036 = vld [vmem:[#allocation2 + $0x3b0] sm:$0xff]
    %v1037 = vld [vmem:[#allocation2 + $0x3b8] sm:$0xff]
    %v1038 = vld [vmem:[#allocation2 + $0x3c0] sm:$0xff]
    %v1039 = vld [vmem:[#allocation2 + $0x3c8] sm:$0xff]
    %v1040 = vld [vmem:[#allocation2 + $0x3d0] sm:$0xff]
    %v1041 = vld [vmem:[#allocation2 + $0x3d8] sm:$0xff]
    %v1042 = vld [vmem:[#allocation2 + $0x3e0] sm:$0xff]
    %v1043 = vld [vmem:[#allocation2 + $0x3e8] sm:$0xff]
    %v1044 = vld [vmem:[#allocation2 + $0x3f0] sm:$0xff]
    %v1045 = vld [vmem:[#allocation2 + $0x3f8] sm:$0xff]
    %v1046 = vld [vmem:[#allocation2 + $0x400] sm:$0xff]
    %v1047 = vld [vmem:[#allocation2 + $0x408] sm:$0xff]
    %v1048 = vld [vmem:[#allocation2 + $0x410] sm:$0xff]
    %v1049 = vld [vmem:[#allocation2 + $0x418] sm:$0xff]
    %v1050 = vld [vmem:[#allocation2 + $0x420] sm:$0xff]
    %v1051 = vld [vmem:[#allocation2 + $0x428] sm:$0xff]
    %v1052 = vld [vmem:[#allocation2 + $0x430] sm:$0xff]
    %v1053 = vld [vmem:[#allocation2 + $0x438] sm:$0xff]
    %s1054 = scalar_lea.vmem [#allocation2], 1602
    %v1055 = vld [vmem:[%s1054] ss:$8 sm:$0x3]
    %v1057 = vlaneseq
    %v1058 = vshrl.u32 %v1057, 7
    %v1059 = vsub.s32 0, %v1058
    %v1060 = vrot.slane %v1055, %v1059
    %v1061 = vlaneseq
    %v1062 = vshrl.u32 %v1061, 7
    %v1063 = vsub.s32 1, %v1062
    %v1064 = vrot.slane %v1055, %v1063
    %1067 = vmatprep.subr.mxu0 %v1021
    %1068 = vmatpush1.msra.mxu0 %v1020
    %1069 = vmatprep.subr.mxu0 %v1019
    %1070 = vmatpush1.msra.mxu0 %v1018
    %1071 = vmatprep.subr.mxu0 %v1017
    %1072 = vmatpush1.msra.mxu0 %v1016
    %1073 = vmatprep.subr.mxu0 %v1015
    %1074 = vmatpush1.msra.mxu0 %v1014
    %1075 = vmatprep.subr.mxu0 %v1013
    %1076 = vmatpush1.msra.mxu0 %v1012
    %1077 = vmatprep.subr.mxu0 %v1011
    %1078 = vmatpush1.msra.mxu0 %v1010
    %1079 = vmatprep.subr.mxu0 %v1009
    %1080 = vmatpush1.msra.mxu0 %v1008
    %1081 = vmatprep.subr.mxu0 %v1007
    %1082 = vmatpush1.msra.mxu0 %v1006
    %1083 = vmatprep.subr.mxu0 %v1005
    %1084 = vmatpush1.msra.mxu0 %v1004
    %1085 = vmatprep.subr.mxu0 %v1003
    %1086 = vmatpush1.msra.mxu0 %v1002
    %1087 = vmatprep.subr.mxu0 %v1001
    %1088 = vmatpush1.msra.mxu0 %v1000
    %1089 = vmatprep.subr.mxu0 %v999
    %1090 = vmatpush1.msra.mxu0 %v998
    %1091 = vmatprep.subr.mxu0 %v997
    %1092 = vmatpush1.msra.mxu0 %v996
    %1093 = vmatprep.subr.mxu0 %v995
    %1094 = vmatpush1.msra.mxu0 %v994
    %1095 = vmatprep.subr.mxu0 %v993
    %1096 = vmatpush1.msra.mxu0 %v992
    %1097 = vmatprep.subr.mxu0 %v991
    %1098 = vmatpush1.msra.mxu0 %v990
    %1099 = vmatprep.subr.mxu0 %v1053
    %1100 = vmatpush2.msra.mxu0 %v1052
    %1101 = vmatprep.subr.mxu0 %v1051
    %1102 = vmatpush2.msra.mxu0 %v1050
    %1103 = vmatprep.subr.mxu0 %v1049
    %1104 = vmatpush2.msra.mxu0 %v1048
    %1105 = vmatprep.subr.mxu0 %v1047
    %1106 = vmatpush2.msra.mxu0 %v1046
    %1107 = vmatprep.subr.mxu0 %v1045
    %1108 = vmatpush2.msra.mxu0 %v1044
    %1109 = vmatprep.subr.mxu0 %v1043
    %1110 = vmatpush2.msra.mxu0 %v1042
    %1111 = vmatprep.subr.mxu0 %v1041
    %1112 = vmatpush2.msra.mxu0 %v1040
    %1113 = vmatprep.subr.mxu0 %v1039
    %1114 = vmatpush2.msra.mxu0 %v1038
    %1115 = vmatprep.subr.mxu0 %v1037
    %1116 = vmatpush2.msra.mxu0 %v1036
    %1117 = vmatprep.subr.mxu0 %v1035
    %1118 = vmatpush2.msra.mxu0 %v1034
    %1119 = vmatprep.subr.mxu0 %v1033
    %1120 = vmatpush2.msra.mxu0 %v1032
    %1121 = vmatprep.subr.mxu0 %v1031
    %1122 = vmatpush2.msra.mxu0 %v1030
    %1123 = vmatprep.subr.mxu0 %v1029
    %1124 = vmatpush2.msra.mxu0 %v1028
    %1125 = vmatprep.subr.mxu0 %v1027
    %1126 = vmatpush2.msra.mxu0 %v1026
    %1127 = vmatprep.subr.mxu0 %v1025
    %1128 = vmatpush2.msra.mxu0 %v1024
    %1129 = vmatprep.subr.mxu0 %v1023
    %1130 = vmatpush2.msra.mxu0 %v1022
    %1131 = vmatprep.mubr.f32.mxu0 %v989
    %1132 = vmatmul.mubr.f32.gmra.mxu0 %v988
    %v1133 = vpop.f32.mrf.mxu0
    %v1134 = vadd.f32 %v1060, %v1133
    %v1135 = vpop.f32.mrf.mxu0
    %v1136 = vadd.f32 %v1064, %v1135
    %1137 = vdwg.mxu0
    %v1138 = vmin.f32 %v1134, 25.0
    %v1139 = vmin.f32 %v1136, 25.0
    %v1140 = vmul.f32 %v1138, 1.442695
    %v1141 = vpow.pop %v1140
    %v1142 = vmul.f32 %v1139, 1.442695
    %v1143 = vpow.pop %v1142
    %v1144 = vadd.f32 %v1141, 1.0
    %v1145 = vadd.f32 %v1143, 1.0
    %v1146 = vmul.f32 %v1144, %v1144
    %v1147 = vmul.f32 %v1145, %v1145
    %v1148 = vadd.f32 %v1146, 1.0
    %v1149 = vadd.f32 %v1147, 1.0
    %v1150 = vrcp.pop %v1148
    %v1151 = vrcp.pop %v1149
    %v1152 = vmul.f32 %v1150, 2.0
    %v1153 = vmul.f32 %v1151, 2.0
    %v1154 = vsub.f32 1.0, %v1152
    %v1155 = vsub.f32 1.0, %v1153
    %v1156 = vmul.f32 %v1134, %v1154
    %v1157 = vmul.f32 %v1136, %v1155
    %v1158 = vld [vmem:[#allocation2 + $0x440] sm:$0xff]
    %v1159 = vld [vmem:[#allocation2 + $0x450] sm:$0xff]
    %v1160 = vld [vmem:[#allocation2 + $0x460] sm:$0xff]
    %v1161 = vld [vmem:[#allocation2 + $0x470] sm:$0xff]
    %v1162 = vld [vmem:[#allocation2 + $0x480] sm:$0xff]
    %v1163 = vld [vmem:[#allocation2 + $0x490] sm:$0xff]
    %v1164 = vld [vmem:[#allocation2 + $0x4a0] sm:$0xff]
    %v1165 = vld [vmem:[#allocation2 + $0x4b0] sm:$0xff]
    %v1166 = vld [vmem:[#allocation2 + $0x4c0] sm:$0xff]
    %v1167 = vld [vmem:[#allocation2 + $0x4d0] sm:$0xff]
    %v1168 = vld [vmem:[#allocation2 + $0x4e0] sm:$0xff]
    %v1169 = vld [vmem:[#allocation2 + $0x4f0] sm:$0xff]
    %v1170 = vld [vmem:[#allocation2 + $0x500] sm:$0xff]
    %v1171 = vld [vmem:[#allocation2 + $0x510] sm:$0xff]
    %v1172 = vld [vmem:[#allocation2 + $0x520] sm:$0xff]
    %v1173 = vld [vmem:[#allocation2 + $0x530] sm:$0xff]
    %v1174 = vld [vmem:[#allocation2 + $0x540] sm:$0xff]
    %v1175 = vld [vmem:[#allocation2 + $0x550] sm:$0xff]
    %v1176 = vld [vmem:[#allocation2 + $0x560] sm:$0xff]
    %v1177 = vld [vmem:[#allocation2 + $0x570] sm:$0xff]
    %v1178 = vld [vmem:[#allocation2 + $0x580] sm:$0xff]
    %v1179 = vld [vmem:[#allocation2 + $0x590] sm:$0xff]
    %v1180 = vld [vmem:[#allocation2 + $0x5a0] sm:$0xff]
    %v1181 = vld [vmem:[#allocation2 + $0x5b0] sm:$0xff]
    %v1182 = vld [vmem:[#allocation2 + $0x5c0] sm:$0xff]
    %v1183 = vld [vmem:[#allocation2 + $0x5d0] sm:$0xff]
    %v1184 = vld [vmem:[#allocation2 + $0x5e0] sm:$0xff]
    %v1185 = vld [vmem:[#allocation2 + $0x5f0] sm:$0xff]
    %v1186 = vld [vmem:[#allocation2 + $0x600] sm:$0xff]
    %v1187 = vld [vmem:[#allocation2 + $0x610] sm:$0xff]
    %v1188 = vld [vmem:[#allocation2 + $0x620] sm:$0xff]
    %v1189 = vld [vmem:[#allocation2 + $0x630] sm:$0xff]
    %v1190 = vld [vmem:[#allocation2 + $0x643] ss:$0 sm:$0xff]
    %1191 = vmatprep.subr.mxu0 0.0
    %1192 = vmatpush1.msra.mxu0 %v1173
    %1193 = vmatprep.subr.mxu0 0.0
    %1194 = vmatpush1.msra.mxu0 %v1172
    %1195 = vmatprep.subr.mxu0 0.0
    %1196 = vmatpush1.msra.mxu0 %v1171
    %1197 = vmatprep.subr.mxu0 0.0
    %1198 = vmatpush1.msra.mxu0 %v1170
    %1199 = vmatprep.subr.mxu0 0.0
    %1200 = vmatpush1.msra.mxu0 %v1169
    %1201 = vmatprep.subr.mxu0 0.0
    %1202 = vmatpush1.msra.mxu0 %v1168
    %1203 = vmatprep.subr.mxu0 0.0
    %1204 = vmatpush1.msra.mxu0 %v1167
    %1205 = vmatprep.subr.mxu0 0.0
    %1206 = vmatpush1.msra.mxu0 %v1166
    %1207 = vmatprep.subr.mxu0 0.0
    %1208 = vmatpush1.msra.mxu0 %v1165
    %1209 = vmatprep.subr.mxu0 0.0
    %1210 = vmatpush1.msra.mxu0 %v1164
    %1211 = vmatprep.subr.mxu0 0.0
    %1212 = vmatpush1.msra.mxu0 %v1163
    %1213 = vmatprep.subr.mxu0 0.0
    %1214 = vmatpush1.msra.mxu0 %v1162
    %1215 = vmatprep.subr.mxu0 0.0
    %1216 = vmatpush1.msra.mxu0 %v1161
    %1217 = vmatprep.subr.mxu0 0.0
    %1218 = vmatpush1.msra.mxu0 %v1160
    %1219 = vmatprep.subr.mxu0 0.0
    %1220 = vmatpush1.msra.mxu0 %v1159
    %1221 = vmatprep.subr.mxu0 0.0
    %1222 = vmatpush1.msra.mxu0 %v1158
    %1223 = vmatprep.subr.mxu0 0.0
    %1224 = vmatpush2.msra.mxu0 %v1189
    %1225 = vmatprep.subr.mxu0 0.0
    %1226 = vmatpush2.msra.mxu0 %v1188
    %1227 = vmatprep.subr.mxu0 0.0
    %1228 = vmatpush2.msra.mxu0 %v1187
    %1229 = vmatprep.subr.mxu0 0.0
    %1230 = vmatpush2.msra.mxu0 %v1186
    %1231 = vmatprep.subr.mxu0 0.0
    %1232 = vmatpush2.msra.mxu0 %v1185
    %1233 = vmatprep.subr.mxu0 0.0
    %1234 = vmatpush2.msra.mxu0 %v1184
    %1235 = vmatprep.subr.mxu0 0.0
    %1236 = vmatpush2.msra.mxu0 %v1183
    %1237 = vmatprep.subr.mxu0 0.0
    %1238 = vmatpush2.msra.mxu0 %v1182
    %1239 = vmatprep.subr.mxu0 0.0
    %1240 = vmatpush2.msra.mxu0 %v1181
    %1241 = vmatprep.subr.mxu0 0.0
    %1242 = vmatpush2.msra.mxu0 %v1180
    %1243 = vmatprep.subr.mxu0 0.0
    %1244 = vmatpush2.msra.mxu0 %v1179
    %1245 = vmatprep.subr.mxu0 0.0
    %1246 = vmatpush2.msra.mxu0 %v1178
    %1247 = vmatprep.subr.mxu0 0.0
    %1248 = vmatpush2.msra.mxu0 %v1177
    %1249 = vmatprep.subr.mxu0 0.0
    %1250 = vmatpush2.msra.mxu0 %v1176
    %1251 = vmatprep.subr.mxu0 0.0
    %1252 = vmatpush2.msra.mxu0 %v1175
    %1253 = vmatprep.subr.mxu0 0.0
    %1254 = vmatpush2.msra.mxu0 %v1174
    %1255 = vmatprep.mubr.f32.mxu0 %v1157
    %1256 = vmatmul.mubr.f32.gmra.mxu0 %v1156
    %v1257 = vpop.f32.mrf.mxu0
    %v1258 = vadd.f32 %v1190, %v1257
    %v1259 = vpop.f32.mrf.mxu0
    %1260 = vdwg.mxu0
    %1261 = vst [vmem:[%s5] sm:$0xff] %v1258
    // Predicated region
    $region26: #{mlp_forward.1} parent=1 // pred_check
      _
    $region27: #{mlp_forward.1} parent=1 // pred_check_branch
      %1263 = sbr.rel (0) target = $region29
    $region28: #{mlp_forward.1} parent=1 // pred_region
      _
    $region29: #{mlp_forward.1} parent=1 // pred_fallthru
      _
    // Predicated region
    $region30: #{mlp_forward.1} parent=1 // pred_check
      _
    $region31: #{mlp_forward.1} parent=1 // pred_check_branch
      %1265 = sbr.rel (0) target = $region33
    $region32: #{mlp_forward.1} parent=1 // pred_region
      _
    $region33: #{mlp_forward.1} parent=1 // pred_fallthru
      _
    %1266 = vsyncpa [#allocation3], 1

</llo_original>
